<compile_context>
chip_gen: v5e
topology: v5e:2x2
jax: 0.10.0
libtpu: 0.0.40
codegen_flags: <defaults>
</compile_context>

<pallas_src>
import functools

import jax
import jax.numpy as jnp
from jax.experimental import pallas as pl
from jax.experimental.pallas import tpu as pltpu

NCHUNK = 6   # lcm(2, 3): torch.chunk(x, 2, dim=2) and chunk(x, 3, dim=2) are
             # unions of these 6 horizontal strips (requires H % 6 == 0).
NBRANCH = 3  # b1 / b2 / b3
NHEADS = 8   # b1, b2, b3, b21, b22, b31, b32, b33 (eval concat order)


def _full_spec(shape):
    nd = len(shape)
    return pl.BlockSpec(shape, lambda *_: (0,) * nd)


def _pick_row_tile(chunk_rows, target=512):
    """Largest multiple-of-8 divisor of chunk_rows that is <= target."""
    if chunk_rows <= target:
        return chunk_rows
    for cand in range(target, 7, -8):
        if chunk_rows % cand == 0:
            return cand
    return chunk_rows


def _vmem_limit_bytes():
    """Per-generation VMEM budget: ~3/4 of physical VMEM, capped at 100 MiB."""
    fallback = 64 * 1024 * 1024  # safe on every generation (v7x physical = 64 MiB)
    try:
        cap = int(getattr(pltpu.get_tpu_info(), "vmem_capacity_bytes", fallback))
    except Exception:
        cap = fallback
    return int(min(cap * 3 // 4, 100 * 1024 * 1024))


# ---------------------------------------------------------------------------
# Kernel 1: fused preprocess + backbone-proxy + per-branch matmul + ReLU +
#           per-H-strip spatial sum (row-tiled accumulator).
# ---------------------------------------------------------------------------
def fused_branch_pool_kernel(x_ref, w0_ref, b0_ref, wbr_ref, sums_ref):
    # x_ref:    (1, row_tile, Cin)     f32 raw pixels (mean/std folded into w0/b0)
    # w0_ref:   (Cin, Cmid)            f32 backbone-proxy weight (whole-array VMEM)
    # b0_ref:   (1, Cmid)              f32 folded preprocess bias (whole-array VMEM)
    # wbr_ref:  (1, Cmid, Cfeat)       bf16 weight of the current branch
    # sums_ref: (1, 1, NCHUNK, Cfeat)  f32 per-strip sums; resident across the two
    #                                  inner ("arbitrary") grid axes (strip, rowtile)
    c = pl.program_id(2)   # H-strip index
    r = pl.program_id(3)   # row-tile index within the strip

    @pl.when((c == 0) & (r == 0))
    def _init():
        sums_ref[...] = jnp.zeros_like(sums_ref)

    x = x_ref[0]                                                    # (rows, Cin) f32
    # K = Cin (=3) contraction is negligible work; keep it in f32 so the raw
    # 0..255 pixels are never quantized to bf16 before normalization.
    feat = jnp.dot(x, w0_ref[...], preferred_element_type=jnp.float32)
    feat = jnp.maximum(feat + b0_ref[...], 0.0)                     # backbone proxy
    y = jnp.dot(feat.astype(jnp.bfloat16), wbr_ref[0],
                preferred_element_type=jnp.float32)
    y = jnp.maximum(y, 0.0)                                         # (rows, Cfeat)

    # accumulate this row-tile's spatial partial sum into the strip's row of
    # the resident output block (global/half/third avg-pools are finished in
    # the heads kernel; the 1/count is folded into the head weights).
    part = jnp.sum(y, axis=0, keepdims=True)                        # (1, Cfeat)
    cur = sums_ref[0, 0, pl.ds(c, 1), :]
    sums_ref[0, 0, pl.ds(c, 1), :] = cur + part


def run_fused_branch_pool(x, w0, b0, wbr, *, chunk_rows):
    B, S, Cin = x.shape
    Cmid = w0.shape[1]
    nbr, _, Cfeat = wbr.shape
    row_tile = _pick_row_tile(chunk_rows)
    tiles_per_strip = chunk_rows // row_tile
    out_shape = jax.ShapeDtypeStruct((B, nbr, NCHUNK, Cfeat), jnp.float32)
    return pl.pallas_call(
        fused_branch_pool_kernel,
        grid=(B, nbr, NCHUNK, tiles_per_strip),
        in_specs=[
            pl.BlockSpec((1, row_tile, Cin),
                         lambda b, j, c, r: (b, c * tiles_per_strip + r, 0)),
            # tiny loop-invariant constants: whole-array VMEM residents
            pl.BlockSpec(memory_space=pltpu.MemorySpace.VMEM),   # w0
            pl.BlockSpec(memory_space=pltpu.MemorySpace.VMEM),   # b0
            # one branch slab per step (pipelined), instead of the full wide weight
            pl.BlockSpec((1, Cmid, Cfeat), lambda b, j, c, r: (j, 0, 0)),
        ],
        out_specs=pl.BlockSpec((1, 1, NCHUNK, Cfeat),
                               lambda b, j, c, r: (b, j, 0, 0)),
        out_shape=out_shape,
        compiler_params=pltpu.CompilerParams(
            dimension_semantics=("parallel", "parallel", "arbitrary", "arbitrary"),
            vmem_limit_bytes=_vmem_limit_bytes(),
        ),
    )(x, w0, b0, wbr)


# ---------------------------------------------------------------------------
# Kernel 2: all 8 (pool -> reduce -> BN -> ReLU -> BNneck) heads in one call,
#           producing the already-concatenated lane-dense (B, 8*Cred) output.
#           (Negligible FLOPs relative to kernel 1 — kept simple on purpose.)
# ---------------------------------------------------------------------------
def heads_kernel(sums_ref, w_ref, b1_ref, s2_ref, b2_ref, o_ref):
    # sums_ref: (B, 3, NCHUNK, Cfeat) f32 per-strip spatial sums
    # w_ref:    (8, Cfeat, Cred)      bf16 (reduce-conv BN scale + 1/pool-count folded)
    # b1_ref:   (8, 1, Cred)          f32 folded reduce-conv BN bias
    # s2_ref:   (8, 1, Cred)          f32 folded head-BNneck scale
    # b2_ref:   (8, 1, Cred)          f32 folded head-BNneck bias
    # o_ref:    (B, 8*Cred)           f32 concatenated eval features
    sums = sums_ref[...]

    def pooled_sum(branch, lo, hi):
        return jnp.sum(sums[:, branch, lo:hi, :], axis=1)           # (B, Cfeat)

    pools = [
        pooled_sum(0, 0, NCHUNK),   # b1  (global)
        pooled_sum(1, 0, NCHUNK),   # b2  (global)
        pooled_sum(2, 0, NCHUNK),   # b3  (global)
        pooled_sum(1, 0, 3),        # b21 (top half of H)
        pooled_sum(1, 3, 6),        # b22 (bottom half)
        pooled_sum(2, 0, 2),        # b31 (first third)
        pooled_sum(2, 2, 4),        # b32 (middle third)
        pooled_sum(2, 4, 6),        # b33 (last third)
    ]
    outs = []
    for h in range(NHEADS):
        y = jnp.dot(pools[h].astype(jnp.bfloat16), w_ref[h],
                    preferred_element_type=jnp.float32)
        y = jnp.maximum(y + b1_ref[h], 0.0)        # reduce conv + BN + ReLU
        y = y * s2_ref[h] + b2_ref[h]              # head BNneck (inference)
        outs.append(y)
    o_ref[...] = jnp.concatenate(outs, axis=1)     # (B, 8*Cred), lane-dense


def run_heads(chunk_sums, w_h, b1_h, s2_h, b2_h):
    B = chunk_sums.shape[0]
    c_red = w_h.shape[-1]
    out_shape = jax.ShapeDtypeStruct((B, NHEADS * c_red), jnp.float32)
    args = (chunk_sums, w_h, b1_h, s2_h, b2_h)
    return pl.pallas_call(
        heads_kernel,
        grid=(1,),
        in_specs=[_full_spec(a.shape) for a in args],
        out_specs=_full_spec(out_shape.shape),
        out_shape=out_shape,
    )(*args)


# ---------------------------------------------------------------------------
# Parameter construction (deterministic, synthetic) and one-time folding
# ---------------------------------------------------------------------------
def make_pool_reduce_head_params(key, c_feat, c_red):
    ks = jax.random.split(key, 3)
    w = jax.random.normal(ks[0], (c_feat, c_red), jnp.float32) * 0.05
    bn_g = 1.0 + 0.01 * jax.random.normal(ks[1], (1, c_red), jnp.float32)
    bn_b = 0.01 * jax.random.normal(ks[2], (1, c_red), jnp.float32)
    bn_m = jnp.zeros((1, c_red), jnp.float32)
    bn_v = jnp.ones((1, c_red), jnp.float32)
    hd_g = jnp.ones((1, c_red), jnp.float32)
    hd_b = jnp.zeros((1, c_red), jnp.float32)
    hd_m = jnp.zeros((1, c_red), jnp.float32)
    hd_v = jnp.ones((1, c_red), jnp.float32)
    return (w, bn_g, bn_b, bn_m, bn_v, hd_g, hd_b, hd_m, hd_v)


def _fold_head(raw, pool_count):
    """Fold avg-pool count, reduce-conv BN and head BNneck into (w, b, s2, b2)."""
    w, bn_g, bn_b, bn_m, bn_v, hd_g, hd_b, hd_m, hd_v = raw
    eps = 1e-5
    scale1 = bn_g * jax.lax.rsqrt(bn_v + eps)                  # (1, Cred)
    w_fold = (w * scale1) / float(pool_count)                  # (Cfeat, Cred)
    b_fold = bn_b - bn_m * scale1                              # (1, Cred)
    scale2 = hd_g * jax.lax.rsqrt(hd_v + eps)                  # (1, Cred)
    b2 = hd_b - hd_m * scale2                                  # (1, Cred)
    return w_fold.astype(jnp.bfloat16), b_fold, scale2, b2


def prepare_params(params, image_hw):
    """One-time weight folding, done OUTSIDE the per-call jit (no per-forward
    rsqrt / concat / cast overhead, no extra HBM round trips of the weights)."""
    H, W = image_hw
    hw = H * W
    mean, std = params["pixel_mean"], params["pixel_std"]          # (1, Cin)
    w0 = params["w_backbone"].astype(jnp.float32)                  # (Cin, Cmid)
    w0_fold = w0 / std[0][:, None]                                 # fold 1/std
    b0 = -(mean / std) @ w0                                        # fold -mean/std

    wbr = jnp.stack([params["w_b1"], params["w_b2"], params["w_b3"]],
                    axis=0).astype(jnp.bfloat16)                   # (3, Cmid, Cfeat)

    head_specs = [("p_b1", hw), ("p_b2", hw), ("p_b3", hw),
                  ("p_b21", hw // 2), ("p_b22", hw // 2),
                  ("p_b31", hw // 3), ("p_b32", hw // 3), ("p_b33", hw // 3)]
    folded = [_fold_head(params[name], cnt) for name, cnt in head_specs]
    return {
        "w0": w0_fold,                                             # f32
        "b0": b0,                                                  # f32
        "wbr": wbr,                                                # bf16
        "w_h": jnp.stack([f[0] for f in folded], axis=0),          # (8,Cfeat,Cred) bf16
        "b1_h": jnp.stack([f[1] for f in folded], axis=0),         # (8,1,Cred)
        "s2_h": jnp.stack([f[2] for f in folded], axis=0),
        "b2_h": jnp.stack([f[3] for f in folded], axis=0),
    }


# ---------------------------------------------------------------------------
# MGN forward (inference / eval path)
# ---------------------------------------------------------------------------
@jax.jit
def mgn_forward(images_nchw, prepared):
    B, Cin, H, W = images_nchw.shape
    assert H % NCHUNK == 0, "H must be divisible by 6 (torch.chunk 2 & 3)"
    chunk_rows = (H // NCHUNK) * W
    assert chunk_rows % 8 == 0, "strip rows should be a multiple of 8 (sublanes)"

    # NCHW -> channels-last (B, H*W, Cin)
    x = jnp.transpose(images_nchw, (0, 2, 3, 1)).reshape(B, H * W, Cin)

    chunk_sums = run_fused_branch_pool(
        x, prepared["w0"], prepared["b0"], prepared["wbr"], chunk_rows=chunk_rows)

    return run_heads(chunk_sums, prepared["w_h"], prepared["b1_h"],
                     prepared["s2_h"], prepared["b2_h"])


# ---------------------------------------------------------------------------
# Pure-JAX (f32) reference of the same proxy forward, for a sanity check.
# ---------------------------------------------------------------------------
def mgn_reference(images_nchw, params):
    B, Cin, H, W = images_nchw.shape
    x = jnp.transpose(images_nchw, (0, 2, 3, 1)).reshape(B, H * W, Cin)
    xn = (x - params["pixel_mean"]) / params["pixel_std"]
    feat = jnp.maximum(xn @ params["w_backbone"], 0.0)

    def branch(w):
        return jnp.maximum(feat @ w, 0.0).reshape(B, H, W, -1)

    b1, b2, b3 = branch(params["w_b1"]), branch(params["w_b2"]), branch(params["w_b3"])

    def head(m, raw):
        w, g, b, mu, v, hg, hb, hm, hv = raw
        eps = 1e-5
        p = m.reshape(m.shape[0], -1, m.shape[-1]).mean(axis=1)
        y = p @ w
        y = (y - mu) * g * jax.lax.rsqrt(v + eps) + b
        y = jnp.maximum(y, 0.0)
        return (y - hm) * hg * jax.lax.rsqrt(hv + eps) + hb

    h2, h3 = H // 2, H // 3
    outs = [head(b1, params["p_b1"]), head(b2, params["p_b2"]), head(b3, params["p_b3"]),
            head(b2[:, :h2], params["p_b21"]), head(b2[:, h2:], params["p_b22"]),
            head(b3[:, :h3], params["p_b31"]), head(b3[:, h3:2 * h3], params["p_b32"]),
            head(b3[:, 2 * h3:], params["p_b33"])]
    return jnp.concatenate(outs, axis=1)


# ---------------------------------------------------------------------------
if __name__ == "__main__":
    # small stand-ins; real MGN dims are Cmid=1024, Cfeat=2048, Cred=256.
    B, Cin, H, W = 2, 3, 12, 16          # H divisible by 6 (chunk 2 and 3)
    Cmid, Cfeat, Cred = 32, 128, 32      # Cfeat=128 keeps branch tiles lane-aligned

    key = jax.random.PRNGKey(0)
    keys = jax.random.split(key, 16)

    params = {
        "pixel_mean": jnp.array([[123.675, 116.28, 103.53]], jnp.float32),
        "pixel_std": jnp.array([[58.395, 57.12, 57.375]], jnp.float32),
        "w_backbone": jax.random.normal(keys[0], (Cin, Cmid), jnp.float32) * 0.1,
        "w_b1": jax.random.normal(keys[1], (Cmid, Cfeat), jnp.float32) * 0.05,
        "w_b2": jax.random.normal(keys[2], (Cmid, Cfeat), jnp.float32) * 0.05,
        "w_b3": jax.random.normal(keys[3], (Cmid, Cfeat), jnp.float32) * 0.05,
        "p_b1": make_pool_reduce_head_params(keys[4], Cfeat, Cred),
        "p_b2": make_pool_reduce_head_params(keys[5], Cfeat, Cred),
        "p_b3": make_pool_reduce_head_params(keys[6], Cfeat, Cred),
        "p_b21": make_pool_reduce_head_params(keys[7], Cfeat, Cred),
        "p_b22": make_pool_reduce_head_params(keys[8], Cfeat, Cred),
        "p_b31": make_pool_reduce_head_params(keys[9], Cfeat, Cred),
        "p_b32": make_pool_reduce_head_params(keys[10], Cfeat, Cred),
        "p_b33": make_pool_reduce_head_params(keys[11], Cfeat, Cred),
    }

    images = jax.random.uniform(keys[12], (B, Cin, H, W), jnp.float32,
                                minval=0.0, maxval=255.0)

    # one-time weight folding (kept outside the per-call jit on purpose)
    prepared = prepare_params(params, (H, W))

    out = mgn_forward(images, prepared)
    out = jax.block_until_ready(out)
    assert out.shape == (B, NHEADS * Cred), out.shape
    assert bool(jnp.all(jnp.isfinite(out)))

    # sanity check against the f32 pure-JAX reference (bf16 matmuls -> loose tol)
    ref = mgn_reference(images, params)
    max_diff = float(jnp.max(jnp.abs(out - ref)))
    assert max_diff < 5e-2, f"max diff vs reference too large: {max_diff}"

    print("KERNEL_OK")
</pallas_src>

<mosaic_0001>
module attributes {stable_mosaic.version = 11 : i64} {
  func.func @fused_branch_pool_kernel(%arg0: i32, %arg1: i32, %arg2: i32, %arg3: i32, %arg4: memref<1x32x3xf32, #tpu.memory_space<vmem>>, %arg5: memref<3x32xf32, #tpu.memory_space<vmem>>, %arg6: memref<1x32xf32, #tpu.memory_space<vmem>>, %arg7: memref<1x32x128xbf16, #tpu.memory_space<vmem>>, %arg8: memref<1x1x6x128xf32, #tpu.memory_space<vmem>>) attributes {dimension_semantics = [#tpu.dimension_semantics<parallel>, #tpu.dimension_semantics<parallel>, #tpu.dimension_semantics<arbitrary>, #tpu.dimension_semantics<arbitrary>], iteration_bounds = array<i64: 2, 3, 6, 1>, scalar_prefetch = 0 : i64, scratch_operands = 0 : i64, tpu.core_type = #tpu.core_type<tc>, window_params = [{transform_indices = @transform_0, window_bounds = array<i64: 1, 32, 3>}, {pipeline_mode = #tpu.pipeline_mode<synchronous>, transform_indices = @transform_1, window_bounds = array<i64: 3, 32>}, {pipeline_mode = #tpu.pipeline_mode<synchronous>, transform_indices = @transform_2, window_bounds = array<i64: 1, 32>}, {transform_indices = @transform_3, window_bounds = array<i64: 1, 32, 128>}, {transform_indices = @transform_4, window_bounds = array<i64: 1, 1, 6, 128>}]} {
    %c0_i32 = arith.constant 0 : i32
    %0 = arith.cmpi eq, %arg2, %c0_i32 : i32
    %c0_i32_0 = arith.constant 0 : i32
    %1 = arith.cmpi eq, %arg3, %c0_i32_0 : i32
    %2 = arith.andi %0, %1 : i1
    %3 = arith.extui %2 : i1 to i32
    %c0_i32_1 = arith.constant 0 : i32
    %4 = arith.cmpi ne, %3, %c0_i32_1 : i32
    scf.if %4 {
      %cst_21 = arith.constant 0.000000e+00 : f32
      %30 = vector.broadcast %cst_21 : f32 to vector<1x1x6x128xf32>
      %c0_22 = arith.constant 0 : index
      %c0_23 = arith.constant 0 : index
      %c0_24 = arith.constant 0 : index
      %c0_25 = arith.constant 0 : index
      %31 = vector.load %arg8[%c0_22, %c0_23, %c0_24, %c0_25] : memref<1x1x6x128xf32, #tpu.memory_space<vmem>>, vector<1x1x6x128xf32>
      tpu.vector_store %arg8[%c0_22, %c0_23, %c0_24, %c0_25], %30 {strides = array<i32>} : memref<1x1x6x128xf32, #tpu.memory_space<vmem>>, vector<1x1x6x128xf32>,
    } else {
    }
    %c0 = arith.constant 0 : index
    %c0_2 = arith.constant 0 : index
    %c0_3 = arith.constant 0 : index
    %5 = vector.load %arg4[%c0, %c0_2, %c0_3] : memref<1x32x3xf32, #tpu.memory_space<vmem>>, vector<1x32x3xf32>
    %6 = vector.shape_cast %5 : vector<1x32x3xf32> to vector<32x3xf32>
    %c0_4 = arith.constant 0 : index
    %c0_5 = arith.constant 0 : index
    %7 = vector.load %arg5[%c0_4, %c0_5] : memref<3x32xf32, #tpu.memory_space<vmem>>, vector<3x32xf32>
    %cst = arith.constant dense<0.000000e+00> : vector<32x32xf32>
    %8 = tpu.matmul %6, %7, %cst {dimension_numbers = #tpu.dot_dimension_numbers<[1], [0], [0], [1], [0, 0, 1, 1], [], []>} : vector<32x3xf32>, vector<3x32xf32>, vector<32x32xf32> -> vector<32x32xf32>
    %c0_6 = arith.constant 0 : index
    %c0_7 = arith.constant 0 : index
    %9 = vector.load %arg6[%c0_6, %c0_7] : memref<1x32xf32, #tpu.memory_space<vmem>>, vector<1x32xf32>
    %10 = vector.broadcast %9 : vector<1x32xf32> to vector<32x32xf32>
    %11 = arith.addf %8, %10 : vector<32x32xf32>
    %cst_8 = arith.constant 0.000000e+00 : f32
    %12 = vector.broadcast %cst_8 : f32 to vector<32x32xf32>
    %13 = arith.maximumf %11, %12 : vector<32x32xf32>
    %14 = arith.truncf %13 : vector<32x32xf32> to vector<32x32xbf16>
    %c0_9 = arith.constant 0 : index
    %c0_10 = arith.constant 0 : index
    %c0_11 = arith.constant 0 : index
    %15 = vector.load %arg7[%c0_9, %c0_10, %c0_11] : memref<1x32x128xbf16, #tpu.memory_space<vmem>>, vector<1x32x128xbf16>
    %16 = vector.shape_cast %15 : vector<1x32x128xbf16> to vector<32x128xbf16>
    %cst_12 = arith.constant dense<0.000000e+00> : vector<32x128xf32>
    %17 = tpu.matmul %14, %16, %cst_12 {dimension_numbers = #tpu.dot_dimension_numbers<[1], [0], [0], [1], [0, 0, 1, 1], [], []>} : vector<32x32xbf16>, vector<32x128xbf16>, vector<32x128xf32> -> vector<32x128xf32>
    %cst_13 = arith.constant 0.000000e+00 : f32
    %18 = vector.broadcast %cst_13 : f32 to vector<32x128xf32>
    %19 = arith.maximumf %17, %18 : vector<32x128xf32>
    %cst_14 = arith.constant dense<0.000000e+00> : vector<128xf32>
    %20 = vector.multi_reduction <add>, %19, %cst_14 [0] : vector<32x128xf32> to vector<128xf32>
    %21 = vector.shape_cast %20 : vector<128xf32> to vector<1x128xf32>
    %c0_15 = arith.constant 0 : index
    %c0_16 = arith.constant 0 : index
    %22 = arith.index_cast %arg2 : i32 to index
    %c0_17 = arith.constant 0 : index
    %23 = vector.load %arg8[%c0_15, %c0_16, %22, %c0_17] : memref<1x1x6x128xf32, #tpu.memory_space<vmem>>, vector<1x1x1x128xf32>
    %24 = vector.shape_cast %23 : vector<1x1x1x128xf32> to vector<1x128xf32>
    %25 = arith.addf %24, %21 : vector<1x128xf32>
    %c0_18 = arith.constant 0 : index
    %c0_19 = arith.constant 0 : index
    %26 = arith.index_cast %arg2 : i32 to index
    %c0_20 = arith.constant 0 : index
    %27 = vector.load %arg8[%c0_18, %c0_19, %26, %c0_20] : memref<1x1x6x128xf32, #tpu.memory_space<vmem>>, vector<1x1x1x128xf32>
    %28 = vector.shape_cast %27 : vector<1x1x1x128xf32> to vector<1x128xf32>
    %29 = vector.shape_cast %25 : vector<1x128xf32> to vector<1x1x1x128xf32>
    tpu.vector_store %arg8[%c0_18, %c0_19, %26, %c0_20], %29 {strides = array<i32>} : memref<1x1x6x128xf32, #tpu.memory_space<vmem>>, vector<1x1x1x128xf32>,
    return
  }
  func.func @transform_0(%arg0: i32, %arg1: i32, %arg2: i32, %arg3: i32) -> (i32, i32, i32) {
    %c1_i32 = arith.constant 1 : i32
    %0 = arith.muli %arg2, %c1_i32 : i32
    %1 = arith.addi %0, %arg3 : i32
    %c0_i32 = arith.constant 0 : i32
    %c0_i32_0 = arith.constant 0 : i32
    return %arg0, %1, %c0_i32 : i32, i32, i32
  }
  func.func @transform_1(%arg0: i32, %arg1: i32, %arg2: i32, %arg3: i32) -> (i32, i32) {
    %c0_i32 = arith.constant 0 : i32
    %c0_i32_0 = arith.constant 0 : i32
    %c0_i32_1 = arith.constant 0 : i32
    return %c0_i32, %c0_i32_0 : i32, i32
  }
  func.func @transform_2(%arg0: i32, %arg1: i32, %arg2: i32, %arg3: i32) -> (i32, i32) {
    %c0_i32 = arith.constant 0 : i32
    %c0_i32_0 = arith.constant 0 : i32
    %c0_i32_1 = arith.constant 0 : i32
    return %c0_i32, %c0_i32_0 : i32, i32
  }
  func.func @transform_3(%arg0: i32, %arg1: i32, %arg2: i32, %arg3: i32) -> (i32, i32, i32) {
    %c0_i32 = arith.constant 0 : i32
    %c0_i32_0 = arith.constant 0 : i32
    %c0_i32_1 = arith.constant 0 : i32
    return %arg1, %c0_i32, %c0_i32_0 : i32, i32, i32
  }
  func.func @transform_4(%arg0: i32, %arg1: i32, %arg2: i32, %arg3: i32) -> (i32, i32, i32, i32) {
    %c0_i32 = arith.constant 0 : i32
    %c0_i32_0 = arith.constant 0 : i32
    %c0_i32_1 = arith.constant 0 : i32
    return %arg0, %arg1, %c0_i32, %c0_i32_0 : i32, i32, i32, i32
  }
}

module attributes {stable_mosaic.version = 11 : i64} {
  func.func @heads_kernel(%arg0: i32, %arg1: memref<2x3x6x128xf32, #tpu.memory_space<vmem>>, %arg2: memref<8x128x32xbf16, #tpu.memory_space<vmem>>, %arg3: memref<8x1x32xf32, #tpu.memory_space<vmem>>, %arg4: memref<8x1x32xf32, #tpu.memory_space<vmem>>, %arg5: memref<8x1x32xf32, #tpu.memory_space<vmem>>, %arg6: memref<2x256xf32, #tpu.memory_space<vmem>>) attributes {dimension_semantics = [#tpu.dimension_semantics<arbitrary>], iteration_bounds = array<i64: 1>, scalar_prefetch = 0 : i64, scratch_operands = 0 : i64, tpu.core_type = #tpu.core_type<tc>, window_params = [{pipeline_mode = #tpu.pipeline_mode<synchronous>, transform_indices = @transform_0, window_bounds = array<i64: 2, 3, 6, 128>}, {pipeline_mode = #tpu.pipeline_mode<synchronous>, transform_indices = @transform_1, window_bounds = array<i64: 8, 128, 32>}, {pipeline_mode = #tpu.pipeline_mode<synchronous>, transform_indices = @transform_2, window_bounds = array<i64: 8, 1, 32>}, {pipeline_mode = #tpu.pipeline_mode<synchronous>, transform_indices = @transform_3, window_bounds = array<i64: 8, 1, 32>}, {pipeline_mode = #tpu.pipeline_mode<synchronous>, transform_indices = @transform_4, window_bounds = array<i64: 8, 1, 32>}, {pipeline_mode = #tpu.pipeline_mode<synchronous>, transform_indices = @transform_5, window_bounds = array<i64: 2, 256>}]} {
    %c0 = arith.constant 0 : index
    %c0_0 = arith.constant 0 : index
    %c0_1 = arith.constant 0 : index
    %c0_2 = arith.constant 0 : index
    %0 = vector.load %arg1[%c0, %c0_0, %c0_1, %c0_2] : memref<2x3x6x128xf32, #tpu.memory_space<vmem>>, vector<2x3x6x128xf32>
    %1 = vector.extract_strided_slice %0 {offsets = [0, 0, 0, 0], sizes = [2, 1, 6, 128], strides = [1, 1, 1, 1]} : vector<2x3x6x128xf32> to vector<2x1x6x128xf32>
    %2 = vector.shape_cast %1 : vector<2x1x6x128xf32> to vector<2x6x128xf32>
    %cst = arith.constant dense<0.000000e+00> : vector<2x128xf32>
    %3 = vector.multi_reduction <add>, %2, %cst [1] : vector<2x6x128xf32> to vector<2x128xf32>
    %4 = vector.extract_strided_slice %0 {offsets = [0, 1, 0, 0], sizes = [2, 1, 6, 128], strides = [1, 1, 1, 1]} : vector<2x3x6x128xf32> to vector<2x1x6x128xf32>
    %5 = vector.shape_cast %4 : vector<2x1x6x128xf32> to vector<2x6x128xf32>
    %cst_3 = arith.constant dense<0.000000e+00> : vector<2x128xf32>
    %6 = vector.multi_reduction <add>, %5, %cst_3 [1] : vector<2x6x128xf32> to vector<2x128xf32>
    %7 = vector.extract_strided_slice %0 {offsets = [0, 2, 0, 0], sizes = [2, 1, 6, 128], strides = [1, 1, 1, 1]} : vector<2x3x6x128xf32> to vector<2x1x6x128xf32>
    %8 = vector.shape_cast %7 : vector<2x1x6x128xf32> to vector<2x6x128xf32>
    %cst_4 = arith.constant dense<0.000000e+00> : vector<2x128xf32>
    %9 = vector.multi_reduction <add>, %8, %cst_4 [1] : vector<2x6x128xf32> to vector<2x128xf32>
    %10 = vector.extract_strided_slice %0 {offsets = [0, 1, 0, 0], sizes = [2, 1, 3, 128], strides = [1, 1, 1, 1]} : vector<2x3x6x128xf32> to vector<2x1x3x128xf32>
    %11 = vector.shape_cast %10 : vector<2x1x3x128xf32> to vector<2x3x128xf32>
    %cst_5 = arith.constant dense<0.000000e+00> : vector<2x128xf32>
    %12 = vector.multi_reduction <add>, %11, %cst_5 [1] : vector<2x3x128xf32> to vector<2x128xf32>
    %13 = vector.extract_strided_slice %0 {offsets = [0, 1, 3, 0], sizes = [2, 1, 3, 128], strides = [1, 1, 1, 1]} : vector<2x3x6x128xf32> to vector<2x1x3x128xf32>
    %14 = vector.shape_cast %13 : vector<2x1x3x128xf32> to vector<2x3x128xf32>
    %cst_6 = arith.constant dense<0.000000e+00> : vector<2x128xf32>
    %15 = vector.multi_reduction <add>, %14, %cst_6 [1] : vector<2x3x128xf32> to vector<2x128xf32>
    %16 = vector.extract_strided_slice %0 {offsets = [0, 2, 0, 0], sizes = [2, 1, 2, 128], strides = [1, 1, 1, 1]} : vector<2x3x6x128xf32> to vector<2x1x2x128xf32>
    %17 = vector.shape_cast %16 : vector<2x1x2x128xf32> to vector<2x2x128xf32>
    %cst_7 = arith.constant dense<0.000000e+00> : vector<2x128xf32>
    %18 = vector.multi_reduction <add>, %17, %cst_7 [1] : vector<2x2x128xf32> to vector<2x128xf32>
    %19 = vector.extract_strided_slice %0 {offsets = [0, 2, 2, 0], sizes = [2, 1, 2, 128], strides = [1, 1, 1, 1]} : vector<2x3x6x128xf32> to vector<2x1x2x128xf32>
    %20 = vector.shape_cast %19 : vector<2x1x2x128xf32> to vector<2x2x128xf32>
    %cst_8 = arith.constant dense<0.000000e+00> : vector<2x128xf32>
    %21 = vector.multi_reduction <add>, %20, %cst_8 [1] : vector<2x2x128xf32> to vector<2x128xf32>
    %22 = vector.extract_strided_slice %0 {offsets = [0, 2, 4, 0], sizes = [2, 1, 2, 128], strides = [1, 1, 1, 1]} : vector<2x3x6x128xf32> to vector<2x1x2x128xf32>
    %23 = vector.shape_cast %22 : vector<2x1x2x128xf32> to vector<2x2x128xf32>
    %cst_9 = arith.constant dense<0.000000e+00> : vector<2x128xf32>
    %24 = vector.multi_reduction <add>, %23, %cst_9 [1] : vector<2x2x128xf32> to vector<2x128xf32>
    %25 = arith.truncf %3 : vector<2x128xf32> to vector<2x128xbf16>
    %c0_10 = arith.constant 0 : index
    %c0_11 = arith.constant 0 : index
    %c0_12 = arith.constant 0 : index
    %26 = vector.load %arg2[%c0_10, %c0_11, %c0_12] : memref<8x128x32xbf16, #tpu.memory_space<vmem>>, vector<1x128x32xbf16>
    %27 = vector.shape_cast %26 : vector<1x128x32xbf16> to vector<128x32xbf16>
    %cst_13 = arith.constant dense<0.000000e+00> : vector<2x32xf32>
    %28 = tpu.matmul %25, %27, %cst_13 {dimension_numbers = #tpu.dot_dimension_numbers<[1], [0], [0], [1], [0, 0, 1, 1], [], []>} : vector<2x128xbf16>, vector<128x32xbf16>, vector<2x32xf32> -> vector<2x32xf32>
    %c0_14 = arith.constant 0 : index
    %c0_15 = arith.constant 0 : index
    %c0_16 = arith.constant 0 : index
    %29 = vector.load %arg3[%c0_14, %c0_15, %c0_16] : memref<8x1x32xf32, #tpu.memory_space<vmem>>, vector<1x1x32xf32>
    %30 = vector.shape_cast %29 : vector<1x1x32xf32> to vector<1x32xf32>
    %31 = vector.broadcast %30 : vector<1x32xf32> to vector<2x32xf32>
    %32 = arith.addf %28, %31 : vector<2x32xf32>
    %cst_17 = arith.constant 0.000000e+00 : f32
    %33 = vector.broadcast %cst_17 : f32 to vector<2x32xf32>
    %34 = arith.maximumf %32, %33 : vector<2x32xf32>
    %c0_18 = arith.constant 0 : index
    %c0_19 = arith.constant 0 : index
    %c0_20 = arith.constant 0 : index
    %35 = vector.load %arg4[%c0_18, %c0_19, %c0_20] : memref<8x1x32xf32, #tpu.memory_space<vmem>>, vector<1x1x32xf32>
    %36 = vector.shape_cast %35 : vector<1x1x32xf32> to vector<1x32xf32>
    %37 = vector.broadcast %36 : vector<1x32xf32> to vector<2x32xf32>
    %38 = arith.mulf %34, %37 : vector<2x32xf32>
    %c0_21 = arith.constant 0 : index
    %c0_22 = arith.constant 0 : index
    %c0_23 = arith.constant 0 : index
    %39 = vector.load %arg5[%c0_21, %c0_22, %c0_23] : memref<8x1x32xf32, #tpu.memory_space<vmem>>, vector<1x1x32xf32>
    %40 = vector.shape_cast %39 : vector<1x1x32xf32> to vector<1x32xf32>
    %41 = vector.broadcast %40 : vector<1x32xf32> to vector<2x32xf32>
    %42 = arith.addf %38, %41 : vector<2x32xf32>
    %43 = arith.truncf %6 : vector<2x128xf32> to vector<2x128xbf16>
    %c1 = arith.constant 1 : index
    %c0_24 = arith.constant 0 : index
    %c0_25 = arith.constant 0 : index
    %44 = vector.load %arg2[%c1, %c0_24, %c0_25] : memref<8x128x32xbf16, #tpu.memory_space<vmem>>, vector<1x128x32xbf16>
    %45 = vector.shape_cast %44 : vector<1x128x32xbf16> to vector<128x32xbf16>
    %cst_26 = arith.constant dense<0.000000e+00> : vector<2x32xf32>
    %46 = tpu.matmul %43, %45, %cst_26 {dimension_numbers = #tpu.dot_dimension_numbers<[1], [0], [0], [1], [0, 0, 1, 1], [], []>} : vector<2x128xbf16>, vector<128x32xbf16>, vector<2x32xf32> -> vector<2x32xf32>
    %c1_27 = arith.constant 1 : index
    %c0_28 = arith.constant 0 : index
    %c0_29 = arith.constant 0 : index
    %47 = vector.load %arg3[%c1_27, %c0_28, %c0_29] : memref<8x1x32xf32, #tpu.memory_space<vmem>>, vector<1x1x32xf32>
    %48 = vector.shape_cast %47 : vector<1x1x32xf32> to vector<1x32xf32>
    %49 = vector.broadcast %48 : vector<1x32xf32> to vector<2x32xf32>
    %50 = arith.addf %46, %49 : vector<2x32xf32>
    %cst_30 = arith.constant 0.000000e+00 : f32
    %51 = vector.broadcast %cst_30 : f32 to vector<2x32xf32>
    %52 = arith.maximumf %50, %51 : vector<2x32xf32>
    %c1_31 = arith.constant 1 : index
    %c0_32 = arith.constant 0 : index
    %c0_33 = arith.constant 0 : index
    %53 = vector.load %arg4[%c1_31, %c0_32, %c0_33] : memref<8x1x32xf32, #tpu.memory_space<vmem>>, vector<1x1x32xf32>
    %54 = vector.shape_cast %53 : vector<1x1x32xf32> to vector<1x32xf32>
    %55 = vector.broadcast %54 : vector<1x32xf32> to vector<2x32xf32>
    %56 = arith.mulf %52, %55 : vector<2x32xf32>
    %c1_34 = arith.constant 1 : index
    %c0_35 = arith.constant 0 : index
    %c0_36 = arith.constant 0 : index
    %57 = vector.load %arg5[%c1_34, %c0_35, %c0_36] : memref<8x1x32xf32, #tpu.memory_space<vmem>>, vector<1x1x32xf32>
    %58 = vector.shape_cast %57 : vector<1x1x32xf32> to vector<1x32xf32>
    %59 = vector.broadcast %58 : vector<1x32xf32> to vector<2x32xf32>
    %60 = arith.addf %56, %59 : vector<2x32xf32>
    %61 = arith.truncf %9 : vector<2x128xf32> to vector<2x128xbf16>
    %c2 = arith.constant 2 : index
    %c0_37 = arith.constant 0 : index
    %c0_38 = arith.constant 0 : index
    %62 = vector.load %arg2[%c2, %c0_37, %c0_38] : memref<8x128x32xbf16, #tpu.memory_space<vmem>>, vector<1x128x32xbf16>
    %63 = vector.shape_cast %62 : vector<1x128x32xbf16> to vector<128x32xbf16>
    %cst_39 = arith.constant dense<0.000000e+00> : vector<2x32xf32>
    %64 = tpu.matmul %61, %63, %cst_39 {dimension_numbers = #tpu.dot_dimension_numbers<[1], [0], [0], [1], [0, 0, 1, 1], [], []>} : vector<2x128xbf16>, vector<128x32xbf16>, vector<2x32xf32> -> vector<2x32xf32>
    %c2_40 = arith.constant 2 : index
    %c0_41 = arith.constant 0 : index
    %c0_42 = arith.constant 0 : index
    %65 = vector.load %arg3[%c2_40, %c0_41, %c0_42] : memref<8x1x32xf32, #tpu.memory_space<vmem>>, vector<1x1x32xf32>
    %66 = vector.shape_cast %65 : vector<1x1x32xf32> to vector<1x32xf32>
    %67 = vector.broadcast %66 : vector<1x32xf32> to vector<2x32xf32>
    %68 = arith.addf %64, %67 : vector<2x32xf32>
    %cst_43 = arith.constant 0.000000e+00 : f32
    %69 = vector.broadcast %cst_43 : f32 to vector<2x32xf32>
    %70 = arith.maximumf %68, %69 : vector<2x32xf32>
    %c2_44 = arith.constant 2 : index
    %c0_45 = arith.constant 0 : index
    %c0_46 = arith.constant 0 : index
    %71 = vector.load %arg4[%c2_44, %c0_45, %c0_46] : memref<8x1x32xf32, #tpu.memory_space<vmem>>, vector<1x1x32xf32>
    %72 = vector.shape_cast %71 : vector<1x1x32xf32> to vector<1x32xf32>
    %73 = vector.broadcast %72 : vector<1x32xf32> to vector<2x32xf32>
    %74 = arith.mulf %70, %73 : vector<2x32xf32>
    %c2_47 = arith.constant 2 : index
    %c0_48 = arith.constant 0 : index
    %c0_49 = arith.constant 0 : index
    %75 = vector.load %arg5[%c2_47, %c0_48, %c0_49] : memref<8x1x32xf32, #tpu.memory_space<vmem>>, vector<1x1x32xf32>
    %76 = vector.shape_cast %75 : vector<1x1x32xf32> to vector<1x32xf32>
    %77 = vector.broadcast %76 : vector<1x32xf32> to vector<2x32xf32>
    %78 = arith.addf %74, %77 : vector<2x32xf32>
    %79 = arith.truncf %12 : vector<2x128xf32> to vector<2x128xbf16>
    %c3 = arith.constant 3 : index
    %c0_50 = arith.constant 0 : index
    %c0_51 = arith.constant 0 : index
    %80 = vector.load %arg2[%c3, %c0_50, %c0_51] : memref<8x128x32xbf16, #tpu.memory_space<vmem>>, vector<1x128x32xbf16>
    %81 = vector.shape_cast %80 : vector<1x128x32xbf16> to vector<128x32xbf16>
    %cst_52 = arith.constant dense<0.000000e+00> : vector<2x32xf32>
    %82 = tpu.matmul %79, %81, %cst_52 {dimension_numbers = #tpu.dot_dimension_numbers<[1], [0], [0], [1], [0, 0, 1, 1], [], []>} : vector<2x128xbf16>, vector<128x32xbf16>, vector<2x32xf32> -> vector<2x32xf32>
    %c3_53 = arith.constant 3 : index
    %c0_54 = arith.constant 0 : index
    %c0_55 = arith.constant 0 : index
    %83 = vector.load %arg3[%c3_53, %c0_54, %c0_55] : memref<8x1x32xf32, #tpu.memory_space<vmem>>, vector<1x1x32xf32>
    %84 = vector.shape_cast %83 : vector<1x1x32xf32> to vector<1x32xf32>
    %85 = vector.broadcast %84 : vector<1x32xf32> to vector<2x32xf32>
    %86 = arith.addf %82, %85 : vector<2x32xf32>
    %cst_56 = arith.constant 0.000000e+00 : f32
    %87 = vector.broadcast %cst_56 : f32 to vector<2x32xf32>
    %88 = arith.maximumf %86, %87 : vector<2x32xf32>
    %c3_57 = arith.constant 3 : index
    %c0_58 = arith.constant 0 : index
    %c0_59 = arith.constant 0 : index
    %89 = vector.load %arg4[%c3_57, %c0_58, %c0_59] : memref<8x1x32xf32, #tpu.memory_space<vmem>>, vector<1x1x32xf32>
    %90 = vector.shape_cast %89 : vector<1x1x32xf32> to vector<1x32xf32>
    %91 = vector.broadcast %90 : vector<1x32xf32> to vector<2x32xf32>
    %92 = arith.mulf %88, %91 : vector<2x32xf32>
    %c3_60 = arith.constant 3 : index
    %c0_61 = arith.constant 0 : index
    %c0_62 = arith.constant 0 : index
    %93 = vector.load %arg5[%c3_60, %c0_61, %c0_62] : memref<8x1x32xf32, #tpu.memory_space<vmem>>, vector<1x1x32xf32>
    %94 = vector.shape_cast %93 : vector<1x1x32xf32> to vector<1x32xf32>
    %95 = vector.broadcast %94 : vector<1x32xf32> to vector<2x32xf32>
    %96 = arith.addf %92, %95 : vector<2x32xf32>
    %97 = arith.truncf %15 : vector<2x128xf32> to vector<2x128xbf16>
    %c4 = arith.constant 4 : index
    %c0_63 = arith.constant 0 : index
    %c0_64 = arith.constant 0 : index
    %98 = vector.load %arg2[%c4, %c0_63, %c0_64] : memref<8x128x32xbf16, #tpu.memory_space<vmem>>, vector<1x128x32xbf16>
    %99 = vector.shape_cast %98 : vector<1x128x32xbf16> to vector<128x32xbf16>
    %cst_65 = arith.constant dense<0.000000e+00> : vector<2x32xf32>
    %100 = tpu.matmul %97, %99, %cst_65 {dimension_numbers = #tpu.dot_dimension_numbers<[1], [0], [0], [1], [0, 0, 1, 1], [], []>} : vector<2x128xbf16>, vector<128x32xbf16>, vector<2x32xf32> -> vector<2x32xf32>
    %c4_66 = arith.constant 4 : index
    %c0_67 = arith.constant 0 : index
    %c0_68 = arith.constant 0 : index
    %101 = vector.load %arg3[%c4_66, %c0_67, %c0_68] : memref<8x1x32xf32, #tpu.memory_space<vmem>>, vector<1x1x32xf32>
    %102 = vector.shape_cast %101 : vector<1x1x32xf32> to vector<1x32xf32>
    %103 = vector.broadcast %102 : vector<1x32xf32> to vector<2x32xf32>
    %104 = arith.addf %100, %103 : vector<2x32xf32>
    %cst_69 = arith.constant 0.000000e+00 : f32
    %105 = vector.broadcast %cst_69 : f32 to vector<2x32xf32>
    %106 = arith.maximumf %104, %105 : vector<2x32xf32>
    %c4_70 = arith.constant 4 : index
    %c0_71 = arith.constant 0 : index
    %c0_72 = arith.constant 0 : index
    %107 = vector.load %arg4[%c4_70, %c0_71, %c0_72] : memref<8x1x32xf32, #tpu.memory_space<vmem>>, vector<1x1x32xf32>
    %108 = vector.shape_cast %107 : vector<1x1x32xf32> to vector<1x32xf32>
    %109 = vector.broadcast %108 : vector<1x32xf32> to vector<2x32xf32>
    %110 = arith.mulf %106, %109 : vector<2x32xf32>
    %c4_73 = arith.constant 4 : index
    %c0_74 = arith.constant 0 : index
    %c0_75 = arith.constant 0 : index
    %111 = vector.load %arg5[%c4_73, %c0_74, %c0_75] : memref<8x1x32xf32, #tpu.memory_space<vmem>>, vector<1x1x32xf32>
    %112 = vector.shape_cast %111 : vector<1x1x32xf32> to vector<1x32xf32>
    %113 = vector.broadcast %112 : vector<1x32xf32> to vector<2x32xf32>
    %114 = arith.addf %110, %113 : vector<2x32xf32>
    %115 = arith.truncf %18 : vector<2x128xf32> to vector<2x128xbf16>
    %c5 = arith.constant 5 : index
    %c0_76 = arith.constant 0 : index
    %c0_77 = arith.constant 0 : index
    %116 = vector.load %arg2[%c5, %c0_76, %c0_77] : memref<8x128x32xbf16, #tpu.memory_space<vmem>>, vector<1x128x32xbf16>
    %117 = vector.shape_cast %116 : vector<1x128x32xbf16> to vector<128x32xbf16>
    %cst_78 = arith.constant dense<0.000000e+00> : vector<2x32xf32>
    %118 = tpu.matmul %115, %117, %cst_78 {dimension_numbers = #tpu.dot_dimension_numbers<[1], [0], [0], [1], [0, 0, 1, 1], [], []>} : vector<2x128xbf16>, vector<128x32xbf16>, vector<2x32xf32> -> vector<2x32xf32>
    %c5_79 = arith.constant 5 : index
    %c0_80 = arith.constant 0 : index
    %c0_81 = arith.constant 0 : index
    %119 = vector.load %arg3[%c5_79, %c0_80, %c0_81] : memref<8x1x32xf32, #tpu.memory_space<vmem>>, vector<1x1x32xf32>
    %120 = vector.shape_cast %119 : vector<1x1x32xf32> to vector<1x32xf32>
    %121 = vector.broadcast %120 : vector<1x32xf32> to vector<2x32xf32>
    %122 = arith.addf %118, %121 : vector<2x32xf32>
    %cst_82 = arith.constant 0.000000e+00 : f32
    %123 = vector.broadcast %cst_82 : f32 to vector<2x32xf32>
    %124 = arith.maximumf %122, %123 : vector<2x32xf32>
    %c5_83 = arith.constant 5 : index
    %c0_84 = arith.constant 0 : index
    %c0_85 = arith.constant 0 : index
    %125 = vector.load %arg4[%c5_83, %c0_84, %c0_85] : memref<8x1x32xf32, #tpu.memory_space<vmem>>, vector<1x1x32xf32>
    %126 = vector.shape_cast %125 : vector<1x1x32xf32> to vector<1x32xf32>
    %127 = vector.broadcast %126 : vector<1x32xf32> to vector<2x32xf32>
    %128 = arith.mulf %124, %127 : vector<2x32xf32>
    %c5_86 = arith.constant 5 : index
    %c0_87 = arith.constant 0 : index
    %c0_88 = arith.constant 0 : index
    %129 = vector.load %arg5[%c5_86, %c0_87, %c0_88] : memref<8x1x32xf32, #tpu.memory_space<vmem>>, vector<1x1x32xf32>
    %130 = vector.shape_cast %129 : vector<1x1x32xf32> to vector<1x32xf32>
    %131 = vector.broadcast %130 : vector<1x32xf32> to vector<2x32xf32>
    %132 = arith.addf %128, %131 : vector<2x32xf32>
    %133 = arith.truncf %21 : vector<2x128xf32> to vector<2x128xbf16>
    %c6 = arith.constant 6 : index
    %c0_89 = arith.constant 0 : index
    %c0_90 = arith.constant 0 : index
    %134 = vector.load %arg2[%c6, %c0_89, %c0_90] : memref<8x128x32xbf16, #tpu.memory_space<vmem>>, vector<1x128x32xbf16>
    %135 = vector.shape_cast %134 : vector<1x128x32xbf16> to vector<128x32xbf16>
    %cst_91 = arith.constant dense<0.000000e+00> : vector<2x32xf32>
    %136 = tpu.matmul %133, %135, %cst_91 {dimension_numbers = #tpu.dot_dimension_numbers<[1], [0], [0], [1], [0, 0, 1, 1], [], []>} : vector<2x128xbf16>, vector<128x32xbf16>, vector<2x32xf32> -> vector<2x32xf32>
    %c6_92 = arith.constant 6 : index
    %c0_93 = arith.constant 0 : index
    %c0_94 = arith.constant 0 : index
    %137 = vector.load %arg3[%c6_92, %c0_93, %c0_94] : memref<8x1x32xf32, #tpu.memory_space<vmem>>, vector<1x1x32xf32>
    %138 = vector.shape_cast %137 : vector<1x1x32xf32> to vector<1x32xf32>
    %139 = vector.broadcast %138 : vector<1x32xf32> to vector<2x32xf32>
    %140 = arith.addf %136, %139 : vector<2x32xf32>
    %cst_95 = arith.constant 0.000000e+00 : f32
    %141 = vector.broadcast %cst_95 : f32 to vector<2x32xf32>
    %142 = arith.maximumf %140, %141 : vector<2x32xf32>
    %c6_96 = arith.constant 6 : index
    %c0_97 = arith.constant 0 : index
    %c0_98 = arith.constant 0 : index
    %143 = vector.load %arg4[%c6_96, %c0_97, %c0_98] : memref<8x1x32xf32, #tpu.memory_space<vmem>>, vector<1x1x32xf32>
    %144 = vector.shape_cast %143 : vector<1x1x32xf32> to vector<1x32xf32>
    %145 = vector.broadcast %144 : vector<1x32xf32> to vector<2x32xf32>
    %146 = arith.mulf %142, %145 : vector<2x32xf32>
    %c6_99 = arith.constant 6 : index
    %c0_100 = arith.constant 0 : index
    %c0_101 = arith.constant 0 : index
    %147 = vector.load %arg5[%c6_99, %c0_100, %c0_101] : memref<8x1x32xf32, #tpu.memory_space<vmem>>, vector<1x1x32xf32>
    %148 = vector.shape_cast %147 : vector<1x1x32xf32> to vector<1x32xf32>
    %149 = vector.broadcast %148 : vector<1x32xf32> to vector<2x32xf32>
    %150 = arith.addf %146, %149 : vector<2x32xf32>
    %151 = arith.truncf %24 : vector<2x128xf32> to vector<2x128xbf16>
    %c7 = arith.constant 7 : index
    %c0_102 = arith.constant 0 : index
    %c0_103 = arith.constant 0 : index
    %152 = vector.load %arg2[%c7, %c0_102, %c0_103] : memref<8x128x32xbf16, #tpu.memory_space<vmem>>, vector<1x128x32xbf16>
    %153 = vector.shape_cast %152 : vector<1x128x32xbf16> to vector<128x32xbf16>
    %cst_104 = arith.constant dense<0.000000e+00> : vector<2x32xf32>
    %154 = tpu.matmul %151, %153, %cst_104 {dimension_numbers = #tpu.dot_dimension_numbers<[1], [0], [0], [1], [0, 0, 1, 1], [], []>} : vector<2x128xbf16>, vector<128x32xbf16>, vector<2x32xf32> -> vector<2x32xf32>
    %c7_105 = arith.constant 7 : index
    %c0_106 = arith.constant 0 : index
    %c0_107 = arith.constant 0 : index
    %155 = vector.load %arg3[%c7_105, %c0_106, %c0_107] : memref<8x1x32xf32, #tpu.memory_space<vmem>>, vector<1x1x32xf32>
    %156 = vector.shape_cast %155 : vector<1x1x32xf32> to vector<1x32xf32>
    %157 = vector.broadcast %156 : vector<1x32xf32> to vector<2x32xf32>
    %158 = arith.addf %154, %157 : vector<2x32xf32>
    %cst_108 = arith.constant 0.000000e+00 : f32
    %159 = vector.broadcast %cst_108 : f32 to vector<2x32xf32>
    %160 = arith.maximumf %158, %159 : vector<2x32xf32>
    %c7_109 = arith.constant 7 : index
    %c0_110 = arith.constant 0 : index
    %c0_111 = arith.constant 0 : index
    %161 = vector.load %arg4[%c7_109, %c0_110, %c0_111] : memref<8x1x32xf32, #tpu.memory_space<vmem>>, vector<1x1x32xf32>
    %162 = vector.shape_cast %161 : vector<1x1x32xf32> to vector<1x32xf32>
    %163 = vector.broadcast %162 : vector<1x32xf32> to vector<2x32xf32>
    %164 = arith.mulf %160, %163 : vector<2x32xf32>
    %c7_112 = arith.constant 7 : index
    %c0_113 = arith.constant 0 : index
    %c0_114 = arith.constant 0 : index
    %165 = vector.load %arg5[%c7_112, %c0_113, %c0_114] : memref<8x1x32xf32, #tpu.memory_space<vmem>>, vector<1x1x32xf32>
    %166 = vector.shape_cast %165 : vector<1x1x32xf32> to vector<1x32xf32>
    %167 = vector.broadcast %166 : vector<1x32xf32> to vector<2x32xf32>
    %168 = arith.addf %164, %167 : vector<2x32xf32>
    %169 = tpu.concatenate %42, %60, %78, %96, %114, %132, %150, %168 in 1 : vector<2x32xf32>, vector<2x32xf32>, vector<2x32xf32>, vector<2x32xf32>, vector<2x32xf32>, vector<2x32xf32>, vector<2x32xf32>, vector<2x32xf32> -> vector<2x256xf32>
    %c0_115 = arith.constant 0 : index
    %c0_116 = arith.constant 0 : index
    %170 = vector.load %arg6[%c0_115, %c0_116] : memref<2x256xf32, #tpu.memory_space<vmem>>, vector<2x256xf32>
    tpu.vector_store %arg6[%c0_115, %c0_116], %169 {strides = array<i32>} : memref<2x256xf32, #tpu.memory_space<vmem>>, vector<2x256xf32>,
    return
  }
  func.func @transform_0(%arg0: i32) -> (i32, i32, i32, i32) {
    %c0_i32 = arith.constant 0 : i32
    %c0_i32_0 = arith.constant 0 : i32
    %c0_i32_1 = arith.constant 0 : i32
    %c0_i32_2 = arith.constant 0 : i32
    %c0_i32_3 = arith.constant 0 : i32
    return %c0_i32, %c0_i32_0, %c0_i32_1, %c0_i32_2 : i32, i32, i32, i32
  }
  func.func @transform_1(%arg0: i32) -> (i32, i32, i32) {
    %c0_i32 = arith.constant 0 : i32
    %c0_i32_0 = arith.constant 0 : i32
    %c0_i32_1 = arith.constant 0 : i32
    %c0_i32_2 = arith.constant 0 : i32
    return %c0_i32, %c0_i32_0, %c0_i32_1 : i32, i32, i32
  }
  func.func @transform_2(%arg0: i32) -> (i32, i32, i32) {
    %c0_i32 = arith.constant 0 : i32
    %c0_i32_0 = arith.constant 0 : i32
    %c0_i32_1 = arith.constant 0 : i32
    %c0_i32_2 = arith.constant 0 : i32
    return %c0_i32, %c0_i32_0, %c0_i32_1 : i32, i32, i32
  }
  func.func @transform_3(%arg0: i32) -> (i32, i32, i32) {
    %c0_i32 = arith.constant 0 : i32
    %c0_i32_0 = arith.constant 0 : i32
    %c0_i32_1 = arith.constant 0 : i32
    %c0_i32_2 = arith.constant 0 : i32
    return %c0_i32, %c0_i32_0, %c0_i32_1 : i32, i32, i32
  }
  func.func @transform_4(%arg0: i32) -> (i32, i32, i32) {
    %c0_i32 = arith.constant 0 : i32
    %c0_i32_0 = arith.constant 0 : i32
    %c0_i32_1 = arith.constant 0 : i32
    %c0_i32_2 = arith.constant 0 : i32
    return %c0_i32, %c0_i32_0, %c0_i32_1 : i32, i32, i32
  }
  func.func @transform_5(%arg0: i32) -> (i32, i32) {
    %c0_i32 = arith.constant 0 : i32
    %c0_i32_0 = arith.constant 0 : i32
    %c0_i32_1 = arith.constant 0 : i32
    return %c0_i32, %c0_i32_0 : i32, i32
  }
}

</mosaic_0001>

<llo_original>
// kernel: mgn_forward.2
$region0: #{mgn_forward.2}
  #allocation0 [shape = 'u32[]', space=smem, size = 0x4, offset = 0x4, fixed_abs, tag = 'smem constant byte address 0x4 - core index']
  #allocation1 [shape = 'u32[72,128]{1,0:T(1,128)}', space=vmem, size = 0x9000, scoped, tag = 'internal scratch']
  %s0 = inlined_call_operand.vmem [shape: f32[2,192,3], index: 0, kind: input, shape index: {}]
  %s1 = inlined_call_operand.vmem [shape: f32[3,32], index: 1, kind: input, shape index: {}]
  %s2 = inlined_call_operand.vmem [shape: f32[1,32], index: 2, kind: input, shape index: {}]
  %s3 = inlined_call_operand.vmem [shape: bf16[3,32,128], index: 3, kind: input, shape index: {}]
  %s4 = inlined_call_operand.vmem [shape: f32[2,3,6,128], index: 4, kind: output, shape index: {}]
  %s5 = sld [smem:[#allocation0]]
  $region53: #{mgn_forward.2} parent=0
    _
  %s7 = ssub.s32 1, %s5
  %s8 = scalar_select 0, %s7, %s5
  loop: start=0, step=1, limit=38
  $region2: #{mgn_forward.2} parent=0 // loop_pre_header
    _
  $region3: #{mgn_forward.2} parent=0 // loop_header
    %s10 = sphi 0, %s14
    %p11 = scmp.ge.s32.totalorder %s10, 38
    %s17 = sphi 0, %s43
    %s18 = sphi 0, %s39
    %s19 = sphi 0, %s35
    %s20 = sphi 0, %s31
    %s21 = sphi 0, %s17
    %s22 = sphi 0, %s18
    %s23 = sphi 0, %s19
    %s24 = sphi 0, %s20
    %s25 = sphi 0, %s21
    %s26 = sphi 0, %s22
    %s27 = sphi 0, %s23
    %s28 = sphi 0, %s24
    %s50 = sphi 0, %s52
    %s53 = sphi 0, %s50
    %s54 = sphi 0, %s53
    %s70 = sphi 0, %s54
    %s74 = sphi 0, %s74
    %s76 = sphi 0, %s74
    %s77 = sphi 0, %s76
    %s91 = sphi 0, %s77
    %s95 = sphi 0, %s95
    %s97 = sphi 0, %s95
    %s98 = sphi 0, %s97
    %s112 = sphi 0, %s98
    %s118 = sphi 0, %s120
    %s121 = sphi 0, %s118
    %s122 = sphi 0, %s121
    %s138 = sphi 0, %s122
    %s146 = sphi 0, %s148
    %s149 = sphi 0, %s146
    %s150 = sphi 0, %s149
    %s166 = sphi 0, %s150
  $region4: #{mgn_forward.2} parent=0 // loop_header_branch
    %13 = sbr.rel (%p11) target = $region8
  $region5: #{mgn_forward.2} parent=0 // loop_body
    %s15 = ssub.s32 %s10, 1
    %s16 = ssub.s32 %s10, 2
    %s29 = sadd.s32 1, %s20
    %p30 = scmp.ge.s32.totalorder %s29, 1
    %s31 = scalar_select %p30, 0, %s29
    %s32 = sadd.s32 1, %s19
    %s33 = scalar_select %p30, %s32, %s19
    %p34 = scmp.ge.s32.totalorder %s33, 6
    %s35 = scalar_select %p34, 0, %s33
    %s36 = sadd.s32 1, %s18
    %s37 = scalar_select %p34, %s36, %s18
    %p38 = scmp.ge.s32.totalorder %s37, 3
    %s39 = scalar_select %p38, 0, %s37
    %s40 = sadd.s32 1, %s17
    %s41 = scalar_select %p38, %s40, %s17
    %p42 = scmp.ge.s32.totalorder %s41, 2
    %s43 = scalar_select %p42, 0, %s41
    %s44 = sadd.s32 %s19, %s20
    %s45 = sadd.s32 %s35, %s31
    %s46 = ssub.s32 %s17, %s43
    %s47 = ssub.s32 %s44, %s45
    %s48 = sor.u32 %s46, %s47
    %p49 = scmp.eq.s32.totalorder %s48, 0
    %s51 = sadd.s32 %s50, 1
    %s52 = scalar_select %p49, %s50, %s51
    %p55 = pneg %p49
    %p56 = scmp.eq.s32.totalorder %s10, 35
    %p57 = por %p55, %p56
    %p58 = scmp.ne.s32.totalorder %s50, %s53
    %p59 = scmp.eq.s32.totalorder %s10, 0
    %p60 = por %p58, %p59
    %p61 = scmp.ne.s32.totalorder %s50, %s53
    %p62 = scmp.eq.s32.totalorder %s15, 35
    %p63 = por %p61, %p62
    %p64 = scmp.ne.s32.totalorder %s53, %s54
    %p65 = scmp.eq.s32.totalorder %s15, 0
    %p66 = por %p64, %p65
    %p67 = scmp.ne.s32.totalorder %s53, %s54
    %p68 = scmp.eq.s32.totalorder %s16, 35
    %p69 = por %p67, %p68
    %p71 = scmp.ne.s32.totalorder %s54, %s70
    %p72 = scmp.eq.s32.totalorder %s16, 0
    %p73 = por %p71, %p72
    %s75 = sadd.s32 %s74, 1
    %p78 = scmp.eq.s32.totalorder %s10, 35
    %p79 = scmp.ne.s32.totalorder %s74, %s76
    %p80 = scmp.eq.s32.totalorder %s10, 0
    %p81 = por %p79, %p80
    %p82 = scmp.ne.s32.totalorder %s74, %s76
    %p83 = scmp.eq.s32.totalorder %s15, 35
    %p84 = por %p82, %p83
    %p85 = scmp.ne.s32.totalorder %s76, %s77
    %p86 = scmp.eq.s32.totalorder %s15, 0
    %p87 = por %p85, %p86
    %p88 = scmp.ne.s32.totalorder %s76, %s77
    %p89 = scmp.eq.s32.totalorder %s16, 35
    %p90 = por %p88, %p89
    %p92 = scmp.ne.s32.totalorder %s77, %s91
    %p93 = scmp.eq.s32.totalorder %s16, 0
    %p94 = por %p92, %p93
    %s96 = sadd.s32 %s95, 1
    %p99 = scmp.eq.s32.totalorder %s10, 35
    %p100 = scmp.ne.s32.totalorder %s95, %s97
    %p101 = scmp.eq.s32.totalorder %s10, 0
    %p102 = por %p100, %p101
    %p103 = scmp.ne.s32.totalorder %s95, %s97
    %p104 = scmp.eq.s32.totalorder %s15, 35
    %p105 = por %p103, %p104
    %p106 = scmp.ne.s32.totalorder %s97, %s98
    %p107 = scmp.eq.s32.totalorder %s15, 0
    %p108 = por %p106, %p107
    %p109 = scmp.ne.s32.totalorder %s97, %s98
    %p110 = scmp.eq.s32.totalorder %s16, 35
    %p111 = por %p109, %p110
    %p113 = scmp.ne.s32.totalorder %s98, %s112
    %p114 = scmp.eq.s32.totalorder %s16, 0
    %p115 = por %p113, %p114
    %s116 = ssub.s32 %s18, %s39
    %p117 = scmp.eq.s32.totalorder %s116, 0
    %s119 = sadd.s32 %s118, 1
    %s120 = scalar_select %p117, %s118, %s119
    %p123 = pneg %p117
    %p124 = scmp.eq.s32.totalorder %s10, 35
    %p125 = por %p123, %p124
    %p126 = scmp.ne.s32.totalorder %s118, %s121
    %p127 = scmp.eq.s32.totalorder %s10, 0
    %p128 = por %p126, %p127
    %p129 = scmp.ne.s32.totalorder %s118, %s121
    %p130 = scmp.eq.s32.totalorder %s15, 35
    %p131 = por %p129, %p130
    %p132 = scmp.ne.s32.totalorder %s121, %s122
    %p133 = scmp.eq.s32.totalorder %s15, 0
    %p134 = por %p132, %p133
    %p135 = scmp.ne.s32.totalorder %s121, %s122
    %p136 = scmp.eq.s32.totalorder %s16, 35
    %p137 = por %p135, %p136
    %p139 = scmp.ne.s32.totalorder %s122, %s138
    %p140 = scmp.eq.s32.totalorder %s16, 0
    %p141 = por %p139, %p140
    %s142 = ssub.s32 %s17, %s43
    %s143 = ssub.s32 %s18, %s39
    %s144 = sor.u32 %s142, %s143
    %p145 = scmp.eq.s32.totalorder %s144, 0
    %s147 = sadd.s32 %s146, 1
    %s148 = scalar_select %p145, %s146, %s147
    %p151 = pneg %p145
    %p152 = scmp.eq.s32.totalorder %s10, 35
    %p153 = por %p151, %p152
    %p154 = scmp.ne.s32.totalorder %s146, %s149
    %p155 = scmp.eq.s32.totalorder %s10, 0
    %p156 = por %p154, %p155
    %p157 = scmp.ne.s32.totalorder %s146, %s149
    %p158 = scmp.eq.s32.totalorder %s15, 35
    %p159 = por %p157, %p158
    %p160 = scmp.ne.s32.totalorder %s149, %s150
    %p161 = scmp.eq.s32.totalorder %s15, 0
    %p162 = por %p160, %p161
    %p163 = scmp.ne.s32.totalorder %s149, %s150
    %p164 = scmp.eq.s32.totalorder %s16, 35
    %p165 = por %p163, %p164
    %p167 = scmp.ne.s32.totalorder %s150, %s166
    %p168 = scmp.eq.s32.totalorder %s16, 0
    %p169 = por %p167, %p168
    %p170 = scmp.le.s32.totalorder 1, %s10
    %p171 = scmp.lt.s32.totalorder %s10, 37
    %p172 = pnand %p170, %p171
    %p173 = pneg %p172
    // Predicated region
    $region9: #{mgn_forward.2} parent=5 // pred_check
      _
    $region10: #{mgn_forward.2} parent=5 // pred_check_branch
      %175 = sbr.rel (%p172) target = $region12
    $region11: #{mgn_forward.2} parent=5 // pred_region
      %s176 = ssub.s32 %s10, 1
      // Predicated region
      $region13: #{mgn_forward.2} parent=11 // pred_check
        %p177 = pneg %p87
      $region14: #{mgn_forward.2} parent=11 // pred_check_branch
        %179 = sbr.rel (%p177) target = $region16
      $region15: #{mgn_forward.2} parent=11 // pred_region
        _
      $region16: #{mgn_forward.2} parent=11 // pred_fallthru
        _
      // Predicated region
      $region17: #{mgn_forward.2} parent=11 // pred_check
        %p180 = pneg %p108
      $region18: #{mgn_forward.2} parent=11 // pred_check_branch
        %182 = sbr.rel (%p180) target = $region20
      $region19: #{mgn_forward.2} parent=11 // pred_region
        _
      $region20: #{mgn_forward.2} parent=11 // pred_fallthru
        _
    $region12: #{mgn_forward.2} parent=5 // pred_fallthru
      _
    %p183 = scmp.lt.s32.totalorder %s10, 36
    // Predicated region
    $region21: #{mgn_forward.2} parent=5 // pred_check
      %p184 = pneg %p183
    $region22: #{mgn_forward.2} parent=5 // pred_check_branch
      %186 = sbr.rel (%p184) target = $region24
    $region23: #{mgn_forward.2} parent=5 // pred_region
      // Predicated region
      $region25: #{mgn_forward.2} parent=23 // pred_check
        %p187 = pneg %p60
      $region26: #{mgn_forward.2} parent=23 // pred_check_branch
        %189 = sbr.rel (%p187) target = $region28
      $region27: #{mgn_forward.2} parent=23 // pred_region
        %s190 = sadd.s32 %s19, %s20
        %s191 = smul.u32 4, %s190
        %p192 = scmp.lt.s32.totalorder %s17, 1
        %s193 = scalar_select %p192, %s17, 1
        %p194 = scmp.lt.s32.totalorder %s191, 23
        %s195 = scalar_select %p194, %s191, 23
        %s196 = smul.addr %s193, 24
        %s197 = sadd.s32 %s195, %s196
        %s198 = smul.addr %s197, 8
        %s199 = scalar_lea.vmem %s0, %s198
        %s200 = sadd.s32 %s19, %s20
        %s201 = smul.u32 4, %s200
      $region28: #{mgn_forward.2} parent=23 // pred_fallthru
        _
      // Predicated region
      $region29: #{mgn_forward.2} parent=23 // pred_check
        %p202 = pneg %p128
      $region30: #{mgn_forward.2} parent=23 // pred_check_branch
        %204 = sbr.rel (%p202) target = $region32
      $region31: #{mgn_forward.2} parent=23 // pred_region
        %p205 = scmp.lt.s32.totalorder %s18, 2
        %s206 = scalar_select %p205, %s18, 2
        %s207 = smul.addr %s206, 4
        %s208 = smul.addr %s207, 4
        %s209 = scalar_lea.vmem %s3, %s208
      $region32: #{mgn_forward.2} parent=23 // pred_fallthru
        _
    $region24: #{mgn_forward.2} parent=5 // pred_fallthru
      _
    %p210 = scmp.le.s32.totalorder 1, %s10
    %p211 = scmp.lt.s32.totalorder %s10, 37
    %p212 = pnand %p210, %p211
    %p213 = pneg %p212
    // Predicated region
    $region33: #{mgn_forward.2} parent=5 // pred_check
      _
    $region34: #{mgn_forward.2} parent=5 // pred_check_branch
      %215 = sbr.rel (%p212) target = $region36
    $region35: #{mgn_forward.2} parent=5 // pred_region
      %s216 = ssub.s32 %s10, 1
      %s217 = sadd.s32 %s23, %s24
      %s218 = smul.u32 4, %s217
      %p219 = scmp.lt.s32.totalorder %s21, 1
      %s220 = scalar_select %p219, %s21, 1
      %p221 = scmp.lt.s32.totalorder %s218, 23
      %s222 = scalar_select %p221, %s218, 23
      %s223 = smul.addr %s220, 24
      %s224 = sadd.s32 %s222, %s223
      %s225 = smul.addr %s224, 8
      %s226 = scalar_lea.vmem %s0, %s225
      %p227 = pneg %p66
      %p228 = pneg %p63
      %p229 = pneg %p87
      %p230 = pneg %p84
      %p231 = pneg %p108
      %p232 = pneg %p105
      %p233 = scmp.lt.s32.totalorder %s22, 2
      %s234 = scalar_select %p233, %s22, 2
      %s235 = smul.addr %s234, 4
      %s236 = smul.addr %s235, 4
      %s237 = scalar_lea.vmem %s3, %s236
      %p238 = pneg %p134
      %p239 = pneg %p131
      %p240 = pneg %p162
      %p241 = pneg %p159
      %p242 = scmp.lt.s32.totalorder %s21, 1
      %s243 = scalar_select %p242, %s21, 1
      %p244 = scmp.lt.s32.totalorder %s22, 2
      %s245 = scalar_select %p244, %s22, 2
      %s246 = smul.addr %s243, 3
      %s247 = sadd.s32 %s245, %s246
      %s248 = smul.addr %s247, 8
      %s249 = scalar_lea.vmem %s4, %s248
      %s250 = sadd.s32 %s23, %s24
      %s251 = smul.u32 4, %s250
      %p252 = scmp.lt.s32.totalorder %s21, 1
      %s253 = scalar_select %p252, %s21, 1
      %p254 = scmp.lt.s32.totalorder %s251, 23
      %s255 = scalar_select %p254, %s251, 23
      %s256 = smul.addr %s253, 24
      %s257 = sadd.s32 %s255, %s256
      %s258 = smul.addr %s257, 8
      %s259 = scalar_lea.vmem %s0, %s258
      %s260 = sadd.s32 %s23, %s24
      %s261 = smul.u32 4, %s260
      %p262 = scmp.lt.s32.totalorder %s22, 2
      %s263 = scalar_select %p262, %s22, 2
      %s264 = smul.addr %s263, 4
      %s265 = smul.addr %s264, 4
      %s266 = scalar_lea.vmem %s3, %s265
      %p267 = scmp.lt.s32.totalorder %s21, 1
      %s268 = scalar_select %p267, %s21, 1
      %p269 = scmp.lt.s32.totalorder %s22, 2
      %s270 = scalar_select %p269, %s22, 2
      %s271 = smul.addr %s268, 3
      %s272 = sadd.s32 %s270, %s271
      %s273 = smul.addr %s272, 8
      %s274 = scalar_lea.vmem %s4, %s273
      %p276 = scmp.eq.s32.totalorder %s23, 0
      %p277 = scmp.eq.s32.totalorder %s24, 0
      %p278 = pnand %p276, %p277
      %p279 = pneg %p278
      // Predicated region
      $region37: #{mgn_forward.2} parent=35 // pred_check
        _
      $region38: #{mgn_forward.2} parent=35 // pred_check_branch
        %281 = sbr.rel (%p278) target = $region40
      $region39: #{mgn_forward.2} parent=35 // pred_region
        %282 = vst [vmem:[%s274] sm:$0x3f] 0.0
      $region40: #{mgn_forward.2} parent=35 // pred_fallthru
        _
      %v283 = vld [vmem:[%s259] sm:$0xff]
      %v284 = vld [vmem:[%s259 + $0x8] sm:$0xff]
      %v285 = vld [vmem:[%s259 + $0x10] sm:$0xff]
      %v286 = vld [vmem:[%s259 + $0x18] sm:$0xff]
      %v287 = vld [vmem:[%s1] sm:$0x7]
      %v288 = vld [vmem:[%s2] sm:$0x1]
      %v290 = vperm.slane %v288, 0
      %vm292 = vcmask 23552
      %v294 = vsel %vm292, %v283, 0
      %v297 = vsel %vm292, %v284, 0
      %v300 = vsel %vm292, %v285, 0
      %v303 = vsel %vm292, %v286, 0
      %vm305 = vcmask 1042432
      %v307 = vsel %vm305, %v287, 0
      %309 = vmatpush.msra.mxu0 0.0
      %310 = vmatpush.msra.mxu0 0.0
      %311 = vmatpush.msra.mxu0 0.0
      %312 = vmatpush.msra.mxu0 0.0
      %313 = vmatpush.msra.mxu0 0.0
      %314 = vmatpush.msra.mxu0 0.0
      %315 = vmatpush.msra.mxu0 0.0
      %316 = vmatpush.msra.mxu0 0.0
      %317 = vmatpush.msra.mxu0 0.0
      %318 = vmatpush.msra.mxu0 0.0
      %319 = vmatpush.msra.mxu0 0.0
      %320 = vmatpush.msra.mxu0 0.0
      %321 = vmatpush.msra.mxu0 0.0
      %322 = vmatpush.msra.mxu0 0.0
      %323 = vmatpush.msra.mxu0 0.0
      %324 = vmatpush.msra.mxu0 %v307
      %325 = vmatmul.f32.gmra.mxu0 %v294
      %v326 = vpop.f32.mrf.mxu0
      %v327 = vadd.f32 %v290, %v326
      %328 = vmatmul.f32.gmra.mxu0 %v297
      %v329 = vpop.f32.mrf.mxu0
      %v330 = vadd.f32 %v290, %v329
      %331 = vmatmul.f32.gmra.mxu0 %v300
      %v332 = vpop.f32.mrf.mxu0
      %v333 = vadd.f32 %v290, %v332
      %334 = vmatmul.f32.gmra.mxu0 %v303
      %v335 = vpop.f32.mrf.mxu0
      %v336 = vadd.f32 %v290, %v335
      %337 = vdwg.mxu0
      %v338 = vmax.f32 %v327, 0.0
      %v339 = vmax.f32 %v330, 0.0
      %v340 = vmax.f32 %v333, 0.0
      %v341 = vmax.f32 %v336, 0.0
      %v342 = vpack.c.bf16 %v339, %v338
      %v343 = vpack.c.bf16 %v341, %v340
      %v344 = vld [vmem:[%s266] sm:$0xf]
      %v345 = vld [vmem:[%s266 + $0x4] sm:$0xf]
      %v346 = vld [vmem:[%s266 + $0x8] sm:$0xf]
      %v347 = vld [vmem:[%s266 + $0xc] sm:$0xf]
      %v352 = vunpack.c.l.b16 %v344
      %v353 = vunpack.c.l.b16 %v345
      %v354 = vunpack.c.l.b16 %v346
      %v355 = vunpack.c.l.b16 %v347
      %v356 = vpack.c.b16 %v353, %v352
      %v357 = vpack.c.b16 %v355, %v354
      %vm360 = vcmask 261120
      %v362 = vsel %vm360, %v342, 0
      %v365 = vsel %vm360, %v343, 0
      %367 = vmatpush.bf16.msra.mxu0 0
      %368 = vmatpush.bf16.msra.mxu0 0
      %369 = vmatpush.bf16.msra.mxu0 0
      %370 = vmatpush.bf16.msra.mxu0 0
      %371 = vmatpush.bf16.msra.mxu0 0
      %372 = vmatpush.bf16.msra.mxu0 0
      %373 = vmatpush.bf16.msra.mxu0 %v357
      %374 = vmatpush.bf16.msra.mxu0 %v356
      %375 = vmatmul.bf16.gmra.mxu0 %v362
      %v376 = vpop.f32.mrf.mxu0
      %v377 = vadd.f32 0.0, %v376
      %v378 = vpop.f32.mrf.mxu0
      %v379 = vadd.f32 0.0, %v378
      %380 = vmatmul.bf16.gmra.mxu0 %v365
      %v381 = vpop.f32.mrf.mxu0
      %v382 = vadd.f32 0.0, %v381
      %v383 = vpop.f32.mrf.mxu0
      %v384 = vadd.f32 0.0, %v383
      %385 = vdwg.mxu0
      %v386 = vmax.f32 %v377, 0.0
      %v387 = vmax.f32 %v379, 0.0
      %v388 = vmax.f32 %v382, 0.0
      %v389 = vmax.f32 %v384, 0.0
      %v390 = vadd.f32 %v386, %v387
      %v391 = vadd.f32 %v390, %v388
      %v392 = vadd.f32 %v391, %v389
      %v393 = vrot.slane %v392, 4
      %v394 = vadd.f32 %v392, %v393
      %v395 = vrot.slane %v394, 2
      %v396 = vadd.f32 %v394, %v395
      %v397 = vrot.slane %v396, 1
      %v398 = vadd.f32 %v396, %v397
      %s399 = scalar_lea.vmem %s274, %s23
      %v400 = vld [vmem:[%s399] sm:$0x1]
      %v401 = vadd.f32 %v400, %v398
      %402 = vst [vmem:[%s399] sm:$0x1] %v401
      %p403 = scmp.lt.s32.totalorder %s21, 1
      %s404 = scalar_select %p403, %s21, 1
      %p405 = scmp.lt.s32.totalorder %s22, 2
      %s406 = scalar_select %p405, %s22, 2
      %s407 = smul.addr %s404, 3
      %s408 = sadd.s32 %s406, %s407
      %s409 = smul.addr %s408, 8
      %s410 = scalar_lea.vmem %s4, %s409
      // Predicated region
      $region41: #{mgn_forward.2} parent=35 // pred_check
        %p411 = pneg %p159
      $region42: #{mgn_forward.2} parent=35 // pred_check_branch
        %413 = sbr.rel (%p411) target = $region44
      $region43: #{mgn_forward.2} parent=35 // pred_region
        _
      $region44: #{mgn_forward.2} parent=35 // pred_fallthru
        _
    $region36: #{mgn_forward.2} parent=5 // pred_fallthru
      _
    %p414 = scmp.le.s32.totalorder 2, %s10
    // Predicated region
    $region45: #{mgn_forward.2} parent=5 // pred_check
      %p415 = pneg %p414
    $region46: #{mgn_forward.2} parent=5 // pred_check_branch
      %417 = sbr.rel (%p415) target = $region48
    $region47: #{mgn_forward.2} parent=5 // pred_region
      %s418 = ssub.s32 %s10, 2
      // Predicated region
      $region49: #{mgn_forward.2} parent=47 // pred_check
        %p419 = pneg %p165
      $region50: #{mgn_forward.2} parent=47 // pred_check_branch
        %421 = sbr.rel (%p419) target = $region52
      $region51: #{mgn_forward.2} parent=47 // pred_region
        %p422 = scmp.lt.s32.totalorder %s25, 1
        %s423 = scalar_select %p422, %s25, 1
        %p424 = scmp.lt.s32.totalorder %s26, 2
        %s425 = scalar_select %p424, %s26, 2
        %s426 = smul.addr %s423, 3
        %s427 = sadd.s32 %s425, %s426
        %s428 = smul.addr %s427, 8
        %s429 = scalar_lea.vmem %s4, %s428
      $region52: #{mgn_forward.2} parent=47 // pred_fallthru
        _
    $region48: #{mgn_forward.2} parent=5 // pred_fallthru
      _
  $region6: #{mgn_forward.2} parent=0 // loop_footer
    %s14 = sadd.s32 1, %s10
  $region7: #{mgn_forward.2} parent=0 // loop_footer_branch
    %9 = sbr.rel target = $region3
  $region8: #{mgn_forward.2} parent=0 // loop_exit
    _

// kernel: mgn_forward.3
$region0: #{mgn_forward.3}
  #allocation0 [shape = 'u32[]', space=smem, size = 0x4, offset = 0x4, fixed_abs, tag = 'smem constant byte address 0x4 - core index']
  #allocation1 [shape = 'u32[72,128]{1,0:T(1,128)}', space=vmem, size = 0x9000, scoped, tag = 'internal scratch']
  %s0 = inlined_call_operand.vmem [shape: f32[2,3,6,128], index: 0, kind: input, shape index: {}]
  %s1 = inlined_call_operand.vmem [shape: bf16[8,128,32], index: 1, kind: input, shape index: {}]
  %s2 = inlined_call_operand.vmem [shape: f32[8,1,32], index: 2, kind: input, shape index: {}]
  %s3 = inlined_call_operand.vmem [shape: f32[8,1,32], index: 3, kind: input, shape index: {}]
  %s4 = inlined_call_operand.vmem [shape: f32[8,1,32], index: 4, kind: input, shape index: {}]
  %s5 = inlined_call_operand.hbm [shape: f32[2,256], index: 5, kind: output, shape index: {}]
  %s6 = sld [smem:[#allocation0]]
  $region30: #{mgn_forward.3} parent=0
    _
  %s8 = ssub.s32 1, %s6
  %s9 = scalar_select 0, %s8, %s6
  $region1: #{mgn_forward.3} parent=0
    #allocation2 [shape = 'u8[2048]{0}', space=vmem, size = 0x800, scoped, tag = 'output window, operand 0, single buffered']
    #allocation3 [shape = 's32[1]{0}', space=sflag, size = 0x4, scoped, tag = 'scoped memory for mgn_forward.3']
    %10 = vsyncpa [#allocation3], 0
    // Predicated region
    $region2: #{mgn_forward.3} parent=1 // pred_check
      _
    $region3: #{mgn_forward.3} parent=1 // pred_check_branch
      %12 = sbr.rel (0) target = $region5
    $region4: #{mgn_forward.3} parent=1 // pred_region
      _
    $region5: #{mgn_forward.3} parent=1 // pred_fallthru
      _
    // Predicated region
    $region6: #{mgn_forward.3} parent=1 // pred_check
      _
    $region7: #{mgn_forward.3} parent=1 // pred_check_branch
      %14 = sbr.rel (0) target = $region9
    $region8: #{mgn_forward.3} parent=1 // pred_region
      _
    $region9: #{mgn_forward.3} parent=1 // pred_fallthru
      _
    // Predicated region
    $region10: #{mgn_forward.3} parent=1 // pred_check
      _
    $region11: #{mgn_forward.3} parent=1 // pred_check_branch
      %16 = sbr.rel (0) target = $region13
    $region12: #{mgn_forward.3} parent=1 // pred_region
      _
    $region13: #{mgn_forward.3} parent=1 // pred_fallthru
      _
    // Predicated region
    $region14: #{mgn_forward.3} parent=1 // pred_check
      _
    $region15: #{mgn_forward.3} parent=1 // pred_check_branch
      %18 = sbr.rel (0) target = $region17
    $region16: #{mgn_forward.3} parent=1 // pred_region
      _
    $region17: #{mgn_forward.3} parent=1 // pred_fallthru
      _
    // Predicated region
    $region18: #{mgn_forward.3} parent=1 // pred_check
      _
    $region19: #{mgn_forward.3} parent=1 // pred_check_branch
      %20 = sbr.rel (0) target = $region21
    $region20: #{mgn_forward.3} parent=1 // pred_region
      _
    $region21: #{mgn_forward.3} parent=1 // pred_fallthru
      _
    %v21 = vld [vmem:[%s0] sm:$0x3f]
    %v22 = vld [vmem:[%s0 + $0x8] sm:$0x3f]
    %v23 = vld [vmem:[%s0 + $0x10] sm:$0x3f]
    %v24 = vld [vmem:[%s0 + $0x18] sm:$0x3f]
    %v25 = vld [vmem:[%s0 + $0x20] sm:$0x3f]
    %v26 = vld [vmem:[%s0 + $0x28] sm:$0x3f]
    %vm27 = vcmask 1045504
    %v28 = vsel %vm27, %v21, 0.0
    %v29 = vrot.slane %v28, 4
    %v30 = vadd.f32 %v28, %v29
    %v31 = vrot.slane %v30, 2
    %v32 = vadd.f32 %v30, %v31
    %v33 = vrot.slane %v32, 1
    %v34 = vadd.f32 %v32, %v33
    %v35 = vsel %vm27, %v24, 0.0
    %v36 = vrot.slane %v35, 4
    %v37 = vadd.f32 %v35, %v36
    %v38 = vrot.slane %v37, 2
    %v39 = vadd.f32 %v37, %v38
    %v40 = vrot.slane %v39, 1
    %v41 = vadd.f32 %v39, %v40
    %v42 = vsel %vm27, %v22, 0.0
    %v43 = vrot.slane %v42, 4
    %v44 = vadd.f32 %v42, %v43
    %v45 = vrot.slane %v44, 2
    %v46 = vadd.f32 %v44, %v45
    %v47 = vrot.slane %v46, 1
    %v48 = vadd.f32 %v46, %v47
    %v49 = vsel %vm27, %v25, 0.0
    %v50 = vrot.slane %v49, 4
    %v51 = vadd.f32 %v49, %v50
    %v52 = vrot.slane %v51, 2
    %v53 = vadd.f32 %v51, %v52
    %v54 = vrot.slane %v53, 1
    %v55 = vadd.f32 %v53, %v54
    %v56 = vsel %vm27, %v23, 0.0
    %v57 = vrot.slane %v56, 4
    %v58 = vadd.f32 %v56, %v57
    %v59 = vrot.slane %v58, 2
    %v60 = vadd.f32 %v58, %v59
    %v61 = vrot.slane %v60, 1
    %v62 = vadd.f32 %v60, %v61
    %v63 = vsel %vm27, %v26, 0.0
    %v64 = vrot.slane %v63, 4
    %v65 = vadd.f32 %v63, %v64
    %v66 = vrot.slane %v65, 2
    %v67 = vadd.f32 %v65, %v66
    %v68 = vrot.slane %v67, 1
    %v69 = vadd.f32 %v67, %v68
    %vm70 = vcmask 1042432
    %v71 = vsel %vm70, %v22, 0.0
    %v72 = vrot.slane %v71, 4
    %v73 = vadd.f32 %v71, %v72
    %v74 = vrot.slane %v73, 2
    %v75 = vadd.f32 %v73, %v74
    %v76 = vrot.slane %v75, 1
    %v77 = vadd.f32 %v75, %v76
    %v78 = vsel %vm70, %v25, 0.0
    %v79 = vrot.slane %v78, 4
    %v80 = vadd.f32 %v78, %v79
    %v81 = vrot.slane %v80, 2
    %v82 = vadd.f32 %v80, %v81
    %v83 = vrot.slane %v82, 1
    %v84 = vadd.f32 %v82, %v83
    %v87 = vrot.slane %v22, 3
    %v88 = vrot.slane %v25, 3
    %v91 = vsel %vm70, %v87, 0.0
    %v92 = vrot.slane %v91, 4
    %v93 = vadd.f32 %v91, %v92
    %v94 = vrot.slane %v93, 2
    %v95 = vadd.f32 %v93, %v94
    %v96 = vrot.slane %v95, 1
    %v97 = vadd.f32 %v95, %v96
    %v98 = vsel %vm70, %v88, 0.0
    %v99 = vrot.slane %v98, 4
    %v100 = vadd.f32 %v98, %v99
    %v101 = vrot.slane %v100, 2
    %v102 = vadd.f32 %v100, %v101
    %v103 = vrot.slane %v102, 1
    %v104 = vadd.f32 %v102, %v103
    %vm105 = vcmask 1041408
    %v106 = vsel %vm105, %v23, 0.0
    %v107 = vrot.slane %v106, 4
    %v108 = vadd.f32 %v106, %v107
    %v109 = vrot.slane %v108, 2
    %v110 = vadd.f32 %v108, %v109
    %v111 = vrot.slane %v110, 1
    %v112 = vadd.f32 %v110, %v111
    %v113 = vsel %vm105, %v26, 0.0
    %v114 = vrot.slane %v113, 4
    %v115 = vadd.f32 %v113, %v114
    %v116 = vrot.slane %v115, 2
    %v117 = vadd.f32 %v115, %v116
    %v118 = vrot.slane %v117, 1
    %v119 = vadd.f32 %v117, %v118
    %v122 = vrot.slane %v23, 2
    %v123 = vrot.slane %v26, 2
    %v126 = vsel %vm105, %v122, 0.0
    %v127 = vrot.slane %v126, 4
    %v128 = vadd.f32 %v126, %v127
    %v129 = vrot.slane %v128, 2
    %v130 = vadd.f32 %v128, %v129
    %v131 = vrot.slane %v130, 1
    %v132 = vadd.f32 %v130, %v131
    %v133 = vsel %vm105, %v123, 0.0
    %v134 = vrot.slane %v133, 4
    %v135 = vadd.f32 %v133, %v134
    %v136 = vrot.slane %v135, 2
    %v137 = vadd.f32 %v135, %v136
    %v138 = vrot.slane %v137, 1
    %v139 = vadd.f32 %v137, %v138
    %v140 = vrot.slane %v23, 4
    %v141 = vrot.slane %v26, 4
    %v144 = vsel %vm105, %v140, 0.0
    %v145 = vrot.slane %v144, 4
    %v146 = vadd.f32 %v144, %v145
    %v147 = vrot.slane %v146, 2
    %v148 = vadd.f32 %v146, %v147
    %v149 = vrot.slane %v148, 1
    %v150 = vadd.f32 %v148, %v149
    %v151 = vsel %vm105, %v141, 0.0
    %v152 = vrot.slane %v151, 4
    %v153 = vadd.f32 %v151, %v152
    %v154 = vrot.slane %v153, 2
    %v155 = vadd.f32 %v153, %v154
    %v156 = vrot.slane %v155, 1
    %v157 = vadd.f32 %v155, %v156
    %v158 = vpack.c.bf16 %v34, %v34
    %v159 = vpack.c.bf16 %v41, %v41
    %v160 = vld [vmem:[%s1] sm:$0xf]
    %v161 = vld [vmem:[%s1 + $0x4] sm:$0xf]
    %v162 = vld [vmem:[%s1 + $0x8] sm:$0xf]
    %v163 = vld [vmem:[%s1 + $0xc] sm:$0xf]
    %v164 = vld [vmem:[%s1 + $0x10] sm:$0xf]
    %v165 = vld [vmem:[%s1 + $0x14] sm:$0xf]
    %v166 = vld [vmem:[%s1 + $0x18] sm:$0xf]
    %v167 = vld [vmem:[%s1 + $0x1c] sm:$0xf]
    %v168 = vld [vmem:[%s1 + $0x20] sm:$0xf]
    %v169 = vld [vmem:[%s1 + $0x24] sm:$0xf]
    %v170 = vld [vmem:[%s1 + $0x28] sm:$0xf]
    %v171 = vld [vmem:[%s1 + $0x2c] sm:$0xf]
    %v172 = vld [vmem:[%s1 + $0x30] sm:$0xf]
    %v173 = vld [vmem:[%s1 + $0x34] sm:$0xf]
    %v174 = vld [vmem:[%s1 + $0x38] sm:$0xf]
    %v175 = vld [vmem:[%s1 + $0x3c] sm:$0xf]
    %v176 = vld [vmem:[%s2] sm:$0x1]
    %v178 = vperm.slane %v176, 0
    %v182 = vunpack.c.l.b16 %v158
    %v183 = vunpack.c.l.b16 %v159
    %vm184 = vcmask 1041409
    %v185 = vsel %vm184, %v183, %v182
    %v186 = vpack.c.b16 %v185, %v185
    %v204 = vunpack.c.l.b16 %v160
    %v205 = vunpack.c.l.b16 %v161
    %v206 = vunpack.c.l.b16 %v162
    %v207 = vunpack.c.l.b16 %v163
    %v208 = vunpack.c.l.b16 %v164
    %v209 = vunpack.c.l.b16 %v165
    %v210 = vunpack.c.l.b16 %v166
    %v211 = vunpack.c.l.b16 %v167
    %v212 = vunpack.c.l.b16 %v168
    %v213 = vunpack.c.l.b16 %v169
    %v214 = vunpack.c.l.b16 %v170
    %v215 = vunpack.c.l.b16 %v171
    %v216 = vunpack.c.l.b16 %v172
    %v217 = vunpack.c.l.b16 %v173
    %v218 = vunpack.c.l.b16 %v174
    %v219 = vunpack.c.l.b16 %v175
    %v220 = vpack.c.b16 %v205, %v204
    %v221 = vpack.c.b16 %v207, %v206
    %v222 = vpack.c.b16 %v209, %v208
    %v223 = vpack.c.b16 %v211, %v210
    %v224 = vpack.c.b16 %v213, %v212
    %v225 = vpack.c.b16 %v215, %v214
    %v226 = vpack.c.b16 %v217, %v216
    %v227 = vpack.c.b16 %v219, %v218
    %236 = vmatpush.bf16.msra.mxu0 %v227
    %237 = vmatpush.bf16.msra.mxu0 %v226
    %238 = vmatpush.bf16.msra.mxu0 %v225
    %239 = vmatpush.bf16.msra.mxu0 %v224
    %240 = vmatpush.bf16.msra.mxu0 %v223
    %241 = vmatpush.bf16.msra.mxu0 %v222
    %242 = vmatpush.bf16.msra.mxu0 %v221
    %243 = vmatpush.bf16.msra.mxu0 %v220
    %244 = vmatmul.bf16.gmra.mxu0 %v186
    %v245 = vpop.f32.mrf.mxu0
    %v246 = vadd.f32 %v178, %v245
    %v247 = vpop.f32.mrf.mxu0
    %248 = vdwg.mxu0
    %v249 = vmax.f32 %v246, 0.0
    %v250 = vld [vmem:[%s3] sm:$0x1]
    %v252 = vperm.slane %v250, 0
    %v254 = vmul.f32 %v249, %v252
    %v255 = vld [vmem:[%s4] sm:$0x1]
    %v257 = vperm.slane %v255, 0
    %v259 = vadd.f32 %v254, %v257
    %v260 = vpack.c.bf16 %v48, %v48
    %v261 = vpack.c.bf16 %v55, %v55
    %s262 = scalar_lea.vmem %s1, 64
    %v263 = vld [vmem:[%s262] sm:$0xf]
    %v264 = vld [vmem:[%s262 + $0x4] sm:$0xf]
    %v265 = vld [vmem:[%s262 + $0x8] sm:$0xf]
    %v266 = vld [vmem:[%s262 + $0xc] sm:$0xf]
    %v267 = vld [vmem:[%s262 + $0x10] sm:$0xf]
    %v268 = vld [vmem:[%s262 + $0x14] sm:$0xf]
    %v269 = vld [vmem:[%s262 + $0x18] sm:$0xf]
    %v270 = vld [vmem:[%s262 + $0x1c] sm:$0xf]
    %v271 = vld [vmem:[%s262 + $0x20] sm:$0xf]
    %v272 = vld [vmem:[%s262 + $0x24] sm:$0xf]
    %v273 = vld [vmem:[%s262 + $0x28] sm:$0xf]
    %v274 = vld [vmem:[%s262 + $0x2c] sm:$0xf]
    %v275 = vld [vmem:[%s262 + $0x30] sm:$0xf]
    %v276 = vld [vmem:[%s262 + $0x34] sm:$0xf]
    %v277 = vld [vmem:[%s262 + $0x38] sm:$0xf]
    %v278 = vld [vmem:[%s262 + $0x3c] sm:$0xf]
    %s279 = scalar_lea.vmem %s2, 1
    %v280 = vld [vmem:[%s279] sm:$0x1]
    %v282 = vperm.slane %v280, 0
    %v286 = vunpack.c.l.b16 %v260
    %v287 = vunpack.c.l.b16 %v261
    %v288 = vsel %vm184, %v287, %v286
    %v289 = vpack.c.b16 %v288, %v288
    %v307 = vunpack.c.l.b16 %v263
    %v308 = vunpack.c.l.b16 %v264
    %v309 = vunpack.c.l.b16 %v265
    %v310 = vunpack.c.l.b16 %v266
    %v311 = vunpack.c.l.b16 %v267
    %v312 = vunpack.c.l.b16 %v268
    %v313 = vunpack.c.l.b16 %v269
    %v314 = vunpack.c.l.b16 %v270
    %v315 = vunpack.c.l.b16 %v271
    %v316 = vunpack.c.l.b16 %v272
    %v317 = vunpack.c.l.b16 %v273
    %v318 = vunpack.c.l.b16 %v274
    %v319 = vunpack.c.l.b16 %v275
    %v320 = vunpack.c.l.b16 %v276
    %v321 = vunpack.c.l.b16 %v277
    %v322 = vunpack.c.l.b16 %v278
    %v323 = vpack.c.b16 %v308, %v307
    %v324 = vpack.c.b16 %v310, %v309
    %v325 = vpack.c.b16 %v312, %v311
    %v326 = vpack.c.b16 %v314, %v313
    %v327 = vpack.c.b16 %v316, %v315
    %v328 = vpack.c.b16 %v318, %v317
    %v329 = vpack.c.b16 %v320, %v319
    %v330 = vpack.c.b16 %v322, %v321
    %339 = vmatpush.bf16.msra.mxu0 %v330
    %340 = vmatpush.bf16.msra.mxu0 %v329
    %341 = vmatpush.bf16.msra.mxu0 %v328
    %342 = vmatpush.bf16.msra.mxu0 %v327
    %343 = vmatpush.bf16.msra.mxu0 %v326
    %344 = vmatpush.bf16.msra.mxu0 %v325
    %345 = vmatpush.bf16.msra.mxu0 %v324
    %346 = vmatpush.bf16.msra.mxu0 %v323
    %347 = vmatmul.bf16.gmra.mxu0 %v289
    %v348 = vpop.f32.mrf.mxu0
    %v349 = vadd.f32 %v282, %v348
    %v350 = vpop.f32.mrf.mxu0
    %351 = vdwg.mxu0
    %v352 = vmax.f32 %v349, 0.0
    %s353 = scalar_lea.vmem %s3, 1
    %v354 = vld [vmem:[%s353] sm:$0x1]
    %v356 = vperm.slane %v354, 0
    %v358 = vmul.f32 %v352, %v356
    %s359 = scalar_lea.vmem %s4, 1
    %v360 = vld [vmem:[%s359] sm:$0x1]
    %v362 = vperm.slane %v360, 0
    %v364 = vadd.f32 %v358, %v362
    %v365 = vpack.c.bf16 %v62, %v62
    %v366 = vpack.c.bf16 %v69, %v69
    %s367 = scalar_lea.vmem %s1, 128
    %v368 = vld [vmem:[%s367] sm:$0xf]
    %v369 = vld [vmem:[%s367 + $0x4] sm:$0xf]
    %v370 = vld [vmem:[%s367 + $0x8] sm:$0xf]
    %v371 = vld [vmem:[%s367 + $0xc] sm:$0xf]
    %v372 = vld [vmem:[%s367 + $0x10] sm:$0xf]
    %v373 = vld [vmem:[%s367 + $0x14] sm:$0xf]
    %v374 = vld [vmem:[%s367 + $0x18] sm:$0xf]
    %v375 = vld [vmem:[%s367 + $0x1c] sm:$0xf]
    %v376 = vld [vmem:[%s367 + $0x20] sm:$0xf]
    %v377 = vld [vmem:[%s367 + $0x24] sm:$0xf]
    %v378 = vld [vmem:[%s367 + $0x28] sm:$0xf]
    %v379 = vld [vmem:[%s367 + $0x2c] sm:$0xf]
    %v380 = vld [vmem:[%s367 + $0x30] sm:$0xf]
    %v381 = vld [vmem:[%s367 + $0x34] sm:$0xf]
    %v382 = vld [vmem:[%s367 + $0x38] sm:$0xf]
    %v383 = vld [vmem:[%s367 + $0x3c] sm:$0xf]
    %s384 = scalar_lea.vmem %s2, 2
    %v385 = vld [vmem:[%s384] sm:$0x1]
    %v387 = vperm.slane %v385, 0
    %v391 = vunpack.c.l.b16 %v365
    %v392 = vunpack.c.l.b16 %v366
    %v393 = vsel %vm184, %v392, %v391
    %v394 = vpack.c.b16 %v393, %v393
    %v412 = vunpack.c.l.b16 %v368
    %v413 = vunpack.c.l.b16 %v369
    %v414 = vunpack.c.l.b16 %v370
    %v415 = vunpack.c.l.b16 %v371
    %v416 = vunpack.c.l.b16 %v372
    %v417 = vunpack.c.l.b16 %v373
    %v418 = vunpack.c.l.b16 %v374
    %v419 = vunpack.c.l.b16 %v375
    %v420 = vunpack.c.l.b16 %v376
    %v421 = vunpack.c.l.b16 %v377
    %v422 = vunpack.c.l.b16 %v378
    %v423 = vunpack.c.l.b16 %v379
    %v424 = vunpack.c.l.b16 %v380
    %v425 = vunpack.c.l.b16 %v381
    %v426 = vunpack.c.l.b16 %v382
    %v427 = vunpack.c.l.b16 %v383
    %v428 = vpack.c.b16 %v413, %v412
    %v429 = vpack.c.b16 %v415, %v414
    %v430 = vpack.c.b16 %v417, %v416
    %v431 = vpack.c.b16 %v419, %v418
    %v432 = vpack.c.b16 %v421, %v420
    %v433 = vpack.c.b16 %v423, %v422
    %v434 = vpack.c.b16 %v425, %v424
    %v435 = vpack.c.b16 %v427, %v426
    %444 = vmatpush.bf16.msra.mxu0 %v435
    %445 = vmatpush.bf16.msra.mxu0 %v434
    %446 = vmatpush.bf16.msra.mxu0 %v433
    %447 = vmatpush.bf16.msra.mxu0 %v432
    %448 = vmatpush.bf16.msra.mxu0 %v431
    %449 = vmatpush.bf16.msra.mxu0 %v430
    %450 = vmatpush.bf16.msra.mxu0 %v429
    %451 = vmatpush.bf16.msra.mxu0 %v428
    %452 = vmatmul.bf16.gmra.mxu0 %v394
    %v453 = vpop.f32.mrf.mxu0
    %v454 = vadd.f32 %v387, %v453
    %v455 = vpop.f32.mrf.mxu0
    %456 = vdwg.mxu0
    %v457 = vmax.f32 %v454, 0.0
    %s458 = scalar_lea.vmem %s3, 2
    %v459 = vld [vmem:[%s458] sm:$0x1]
    %v461 = vperm.slane %v459, 0
    %v463 = vmul.f32 %v457, %v461
    %s464 = scalar_lea.vmem %s4, 2
    %v465 = vld [vmem:[%s464] sm:$0x1]
    %v467 = vperm.slane %v465, 0
    %v469 = vadd.f32 %v463, %v467
    %v470 = vpack.c.bf16 %v77, %v77
    %v471 = vpack.c.bf16 %v84, %v84
    %s472 = scalar_lea.vmem %s1, 192
    %v473 = vld [vmem:[%s472] sm:$0xf]
    %v474 = vld [vmem:[%s472 + $0x4] sm:$0xf]
    %v475 = vld [vmem:[%s472 + $0x8] sm:$0xf]
    %v476 = vld [vmem:[%s472 + $0xc] sm:$0xf]
    %v477 = vld [vmem:[%s472 + $0x10] sm:$0xf]
    %v478 = vld [vmem:[%s472 + $0x14] sm:$0xf]
    %v479 = vld [vmem:[%s472 + $0x18] sm:$0xf]
    %v480 = vld [vmem:[%s472 + $0x1c] sm:$0xf]
    %v481 = vld [vmem:[%s472 + $0x20] sm:$0xf]
    %v482 = vld [vmem:[%s472 + $0x24] sm:$0xf]
    %v483 = vld [vmem:[%s472 + $0x28] sm:$0xf]
    %v484 = vld [vmem:[%s472 + $0x2c] sm:$0xf]
    %v485 = vld [vmem:[%s472 + $0x30] sm:$0xf]
    %v486 = vld [vmem:[%s472 + $0x34] sm:$0xf]
    %v487 = vld [vmem:[%s472 + $0x38] sm:$0xf]
    %v488 = vld [vmem:[%s472 + $0x3c] sm:$0xf]
    %s489 = scalar_lea.vmem %s2, 3
    %v490 = vld [vmem:[%s489] sm:$0x1]
    %v492 = vperm.slane %v490, 0
    %v496 = vunpack.c.l.b16 %v470
    %v497 = vunpack.c.l.b16 %v471
    %v498 = vsel %vm184, %v497, %v496
    %v499 = vpack.c.b16 %v498, %v498
    %v517 = vunpack.c.l.b16 %v473
    %v518 = vunpack.c.l.b16 %v474
    %v519 = vunpack.c.l.b16 %v475
    %v520 = vunpack.c.l.b16 %v476
    %v521 = vunpack.c.l.b16 %v477
    %v522 = vunpack.c.l.b16 %v478
    %v523 = vunpack.c.l.b16 %v479
    %v524 = vunpack.c.l.b16 %v480
    %v525 = vunpack.c.l.b16 %v481
    %v526 = vunpack.c.l.b16 %v482
    %v527 = vunpack.c.l.b16 %v483
    %v528 = vunpack.c.l.b16 %v484
    %v529 = vunpack.c.l.b16 %v485
    %v530 = vunpack.c.l.b16 %v486
    %v531 = vunpack.c.l.b16 %v487
    %v532 = vunpack.c.l.b16 %v488
    %v533 = vpack.c.b16 %v518, %v517
    %v534 = vpack.c.b16 %v520, %v519
    %v535 = vpack.c.b16 %v522, %v521
    %v536 = vpack.c.b16 %v524, %v523
    %v537 = vpack.c.b16 %v526, %v525
    %v538 = vpack.c.b16 %v528, %v527
    %v539 = vpack.c.b16 %v530, %v529
    %v540 = vpack.c.b16 %v532, %v531
    %549 = vmatpush.bf16.msra.mxu0 %v540
    %550 = vmatpush.bf16.msra.mxu0 %v539
    %551 = vmatpush.bf16.msra.mxu0 %v538
    %552 = vmatpush.bf16.msra.mxu0 %v537
    %553 = vmatpush.bf16.msra.mxu0 %v536
    %554 = vmatpush.bf16.msra.mxu0 %v535
    %555 = vmatpush.bf16.msra.mxu0 %v534
    %556 = vmatpush.bf16.msra.mxu0 %v533
    %557 = vmatmul.bf16.gmra.mxu0 %v499
    %v558 = vpop.f32.mrf.mxu0
    %v559 = vadd.f32 %v492, %v558
    %v560 = vpop.f32.mrf.mxu0
    %561 = vdwg.mxu0
    %v562 = vmax.f32 %v559, 0.0
    %s563 = scalar_lea.vmem %s3, 3
    %v564 = vld [vmem:[%s563] sm:$0x1]
    %v566 = vperm.slane %v564, 0
    %v568 = vmul.f32 %v562, %v566
    %s569 = scalar_lea.vmem %s4, 3
    %v570 = vld [vmem:[%s569] sm:$0x1]
    %v572 = vperm.slane %v570, 0
    %v574 = vadd.f32 %v568, %v572
    %v575 = vpack.c.bf16 %v97, %v97
    %v576 = vpack.c.bf16 %v104, %v104
    %s577 = scalar_lea.vmem %s1, 256
    %v578 = vld [vmem:[%s577] sm:$0xf]
    %v579 = vld [vmem:[%s577 + $0x4] sm:$0xf]
    %v580 = vld [vmem:[%s577 + $0x8] sm:$0xf]
    %v581 = vld [vmem:[%s577 + $0xc] sm:$0xf]
    %v582 = vld [vmem:[%s577 + $0x10] sm:$0xf]
    %v583 = vld [vmem:[%s577 + $0x14] sm:$0xf]
    %v584 = vld [vmem:[%s577 + $0x18] sm:$0xf]
    %v585 = vld [vmem:[%s577 + $0x1c] sm:$0xf]
    %v586 = vld [vmem:[%s577 + $0x20] sm:$0xf]
    %v587 = vld [vmem:[%s577 + $0x24] sm:$0xf]
    %v588 = vld [vmem:[%s577 + $0x28] sm:$0xf]
    %v589 = vld [vmem:[%s577 + $0x2c] sm:$0xf]
    %v590 = vld [vmem:[%s577 + $0x30] sm:$0xf]
    %v591 = vld [vmem:[%s577 + $0x34] sm:$0xf]
    %v592 = vld [vmem:[%s577 + $0x38] sm:$0xf]
    %v593 = vld [vmem:[%s577 + $0x3c] sm:$0xf]
    %s594 = scalar_lea.vmem %s2, 4
    %v595 = vld [vmem:[%s594] sm:$0x1]
    %v597 = vperm.slane %v595, 0
    %v601 = vunpack.c.l.b16 %v575
    %v602 = vunpack.c.l.b16 %v576
    %v603 = vsel %vm184, %v602, %v601
    %v604 = vpack.c.b16 %v603, %v603
    %v622 = vunpack.c.l.b16 %v578
    %v623 = vunpack.c.l.b16 %v579
    %v624 = vunpack.c.l.b16 %v580
    %v625 = vunpack.c.l.b16 %v581
    %v626 = vunpack.c.l.b16 %v582
    %v627 = vunpack.c.l.b16 %v583
    %v628 = vunpack.c.l.b16 %v584
    %v629 = vunpack.c.l.b16 %v585
    %v630 = vunpack.c.l.b16 %v586
    %v631 = vunpack.c.l.b16 %v587
    %v632 = vunpack.c.l.b16 %v588
    %v633 = vunpack.c.l.b16 %v589
    %v634 = vunpack.c.l.b16 %v590
    %v635 = vunpack.c.l.b16 %v591
    %v636 = vunpack.c.l.b16 %v592
    %v637 = vunpack.c.l.b16 %v593
    %v638 = vpack.c.b16 %v623, %v622
    %v639 = vpack.c.b16 %v625, %v624
    %v640 = vpack.c.b16 %v627, %v626
    %v641 = vpack.c.b16 %v629, %v628
    %v642 = vpack.c.b16 %v631, %v630
    %v643 = vpack.c.b16 %v633, %v632
    %v644 = vpack.c.b16 %v635, %v634
    %v645 = vpack.c.b16 %v637, %v636
    %654 = vmatpush.bf16.msra.mxu0 %v645
    %655 = vmatpush.bf16.msra.mxu0 %v644
    %656 = vmatpush.bf16.msra.mxu0 %v643
    %657 = vmatpush.bf16.msra.mxu0 %v642
    %658 = vmatpush.bf16.msra.mxu0 %v641
    %659 = vmatpush.bf16.msra.mxu0 %v640
    %660 = vmatpush.bf16.msra.mxu0 %v639
    %661 = vmatpush.bf16.msra.mxu0 %v638
    %662 = vmatmul.bf16.gmra.mxu0 %v604
    %v663 = vpop.f32.mrf.mxu0
    %v664 = vadd.f32 %v597, %v663
    %v665 = vpop.f32.mrf.mxu0
    %666 = vdwg.mxu0
    %v667 = vmax.f32 %v664, 0.0
    %s668 = scalar_lea.vmem %s3, 4
    %v669 = vld [vmem:[%s668] sm:$0x1]
    %v671 = vperm.slane %v669, 0
    %v673 = vmul.f32 %v667, %v671
    %s674 = scalar_lea.vmem %s4, 4
    %v675 = vld [vmem:[%s674] sm:$0x1]
    %v677 = vperm.slane %v675, 0
    %v679 = vadd.f32 %v673, %v677
    %v680 = vpack.c.bf16 %v112, %v112
    %v681 = vpack.c.bf16 %v119, %v119
    %s682 = scalar_lea.vmem %s1, 320
    %v683 = vld [vmem:[%s682] sm:$0xf]
    %v684 = vld [vmem:[%s682 + $0x4] sm:$0xf]
    %v685 = vld [vmem:[%s682 + $0x8] sm:$0xf]
    %v686 = vld [vmem:[%s682 + $0xc] sm:$0xf]
    %v687 = vld [vmem:[%s682 + $0x10] sm:$0xf]
    %v688 = vld [vmem:[%s682 + $0x14] sm:$0xf]
    %v689 = vld [vmem:[%s682 + $0x18] sm:$0xf]
    %v690 = vld [vmem:[%s682 + $0x1c] sm:$0xf]
    %v691 = vld [vmem:[%s682 + $0x20] sm:$0xf]
    %v692 = vld [vmem:[%s682 + $0x24] sm:$0xf]
    %v693 = vld [vmem:[%s682 + $0x28] sm:$0xf]
    %v694 = vld [vmem:[%s682 + $0x2c] sm:$0xf]
    %v695 = vld [vmem:[%s682 + $0x30] sm:$0xf]
    %v696 = vld [vmem:[%s682 + $0x34] sm:$0xf]
    %v697 = vld [vmem:[%s682 + $0x38] sm:$0xf]
    %v698 = vld [vmem:[%s682 + $0x3c] sm:$0xf]
    %s699 = scalar_lea.vmem %s2, 5
    %v700 = vld [vmem:[%s699] sm:$0x1]
    %v702 = vperm.slane %v700, 0
    %v706 = vunpack.c.l.b16 %v680
    %v707 = vunpack.c.l.b16 %v681
    %v708 = vsel %vm184, %v707, %v706
    %v709 = vpack.c.b16 %v708, %v708
    %v727 = vunpack.c.l.b16 %v683
    %v728 = vunpack.c.l.b16 %v684
    %v729 = vunpack.c.l.b16 %v685
    %v730 = vunpack.c.l.b16 %v686
    %v731 = vunpack.c.l.b16 %v687
    %v732 = vunpack.c.l.b16 %v688
    %v733 = vunpack.c.l.b16 %v689
    %v734 = vunpack.c.l.b16 %v690
    %v735 = vunpack.c.l.b16 %v691
    %v736 = vunpack.c.l.b16 %v692
    %v737 = vunpack.c.l.b16 %v693
    %v738 = vunpack.c.l.b16 %v694
    %v739 = vunpack.c.l.b16 %v695
    %v740 = vunpack.c.l.b16 %v696
    %v741 = vunpack.c.l.b16 %v697
    %v742 = vunpack.c.l.b16 %v698
    %v743 = vpack.c.b16 %v728, %v727
    %v744 = vpack.c.b16 %v730, %v729
    %v745 = vpack.c.b16 %v732, %v731
    %v746 = vpack.c.b16 %v734, %v733
    %v747 = vpack.c.b16 %v736, %v735
    %v748 = vpack.c.b16 %v738, %v737
    %v749 = vpack.c.b16 %v740, %v739
    %v750 = vpack.c.b16 %v742, %v741
    %759 = vmatpush.bf16.msra.mxu0 %v750
    %760 = vmatpush.bf16.msra.mxu0 %v749
    %761 = vmatpush.bf16.msra.mxu0 %v748
    %762 = vmatpush.bf16.msra.mxu0 %v747
    %763 = vmatpush.bf16.msra.mxu0 %v746
    %764 = vmatpush.bf16.msra.mxu0 %v745
    %765 = vmatpush.bf16.msra.mxu0 %v744
    %766 = vmatpush.bf16.msra.mxu0 %v743
    %767 = vmatmul.bf16.gmra.mxu0 %v709
    %v768 = vpop.f32.mrf.mxu0
    %v769 = vadd.f32 %v702, %v768
    %v770 = vpop.f32.mrf.mxu0
    %771 = vdwg.mxu0
    %v772 = vmax.f32 %v769, 0.0
    %s773 = scalar_lea.vmem %s3, 5
    %v774 = vld [vmem:[%s773] sm:$0x1]
    %v776 = vperm.slane %v774, 0
    %v778 = vmul.f32 %v772, %v776
    %s779 = scalar_lea.vmem %s4, 5
    %v780 = vld [vmem:[%s779] sm:$0x1]
    %v782 = vperm.slane %v780, 0
    %v784 = vadd.f32 %v778, %v782
    %v785 = vpack.c.bf16 %v132, %v132
    %v786 = vpack.c.bf16 %v139, %v139
    %s787 = scalar_lea.vmem %s1, 384
    %v788 = vld [vmem:[%s787] sm:$0xf]
    %v789 = vld [vmem:[%s787 + $0x4] sm:$0xf]
    %v790 = vld [vmem:[%s787 + $0x8] sm:$0xf]
    %v791 = vld [vmem:[%s787 + $0xc] sm:$0xf]
    %v792 = vld [vmem:[%s787 + $0x10] sm:$0xf]
    %v793 = vld [vmem:[%s787 + $0x14] sm:$0xf]
    %v794 = vld [vmem:[%s787 + $0x18] sm:$0xf]
    %v795 = vld [vmem:[%s787 + $0x1c] sm:$0xf]
    %v796 = vld [vmem:[%s787 + $0x20] sm:$0xf]
    %v797 = vld [vmem:[%s787 + $0x24] sm:$0xf]
    %v798 = vld [vmem:[%s787 + $0x28] sm:$0xf]
    %v799 = vld [vmem:[%s787 + $0x2c] sm:$0xf]
    %v800 = vld [vmem:[%s787 + $0x30] sm:$0xf]
    %v801 = vld [vmem:[%s787 + $0x34] sm:$0xf]
    %v802 = vld [vmem:[%s787 + $0x38] sm:$0xf]
    %v803 = vld [vmem:[%s787 + $0x3c] sm:$0xf]
    %s804 = scalar_lea.vmem %s2, 6
    %v805 = vld [vmem:[%s804] sm:$0x1]
    %v807 = vperm.slane %v805, 0
    %v811 = vunpack.c.l.b16 %v785
    %v812 = vunpack.c.l.b16 %v786
    %v813 = vsel %vm184, %v812, %v811
    %v814 = vpack.c.b16 %v813, %v813
    %v832 = vunpack.c.l.b16 %v788
    %v833 = vunpack.c.l.b16 %v789
    %v834 = vunpack.c.l.b16 %v790
    %v835 = vunpack.c.l.b16 %v791
    %v836 = vunpack.c.l.b16 %v792
    %v837 = vunpack.c.l.b16 %v793
    %v838 = vunpack.c.l.b16 %v794
    %v839 = vunpack.c.l.b16 %v795
    %v840 = vunpack.c.l.b16 %v796
    %v841 = vunpack.c.l.b16 %v797
    %v842 = vunpack.c.l.b16 %v798
    %v843 = vunpack.c.l.b16 %v799
    %v844 = vunpack.c.l.b16 %v800
    %v845 = vunpack.c.l.b16 %v801
    %v846 = vunpack.c.l.b16 %v802
    %v847 = vunpack.c.l.b16 %v803
    %v848 = vpack.c.b16 %v833, %v832
    %v849 = vpack.c.b16 %v835, %v834
    %v850 = vpack.c.b16 %v837, %v836
    %v851 = vpack.c.b16 %v839, %v838
    %v852 = vpack.c.b16 %v841, %v840
    %v853 = vpack.c.b16 %v843, %v842
    %v854 = vpack.c.b16 %v845, %v844
    %v855 = vpack.c.b16 %v847, %v846
    %864 = vmatpush.bf16.msra.mxu0 %v855
    %865 = vmatpush.bf16.msra.mxu0 %v854
    %866 = vmatpush.bf16.msra.mxu0 %v853
    %867 = vmatpush.bf16.msra.mxu0 %v852
    %868 = vmatpush.bf16.msra.mxu0 %v851
    %869 = vmatpush.bf16.msra.mxu0 %v850
    %870 = vmatpush.bf16.msra.mxu0 %v849
    %871 = vmatpush.bf16.msra.mxu0 %v848
    %872 = vmatmul.bf16.gmra.mxu0 %v814
    %v873 = vpop.f32.mrf.mxu0
    %v874 = vadd.f32 %v807, %v873
    %v875 = vpop.f32.mrf.mxu0
    %876 = vdwg.mxu0
    %v877 = vmax.f32 %v874, 0.0
    %s878 = scalar_lea.vmem %s3, 6
    %v879 = vld [vmem:[%s878] sm:$0x1]
    %v881 = vperm.slane %v879, 0
    %v883 = vmul.f32 %v877, %v881
    %s884 = scalar_lea.vmem %s4, 6
    %v885 = vld [vmem:[%s884] sm:$0x1]
    %v887 = vperm.slane %v885, 0
    %v889 = vadd.f32 %v883, %v887
    %v890 = vpack.c.bf16 %v150, %v150
    %v891 = vpack.c.bf16 %v157, %v157
    %s892 = scalar_lea.vmem %s1, 448
    %v893 = vld [vmem:[%s892] sm:$0xf]
    %v894 = vld [vmem:[%s892 + $0x4] sm:$0xf]
    %v895 = vld [vmem:[%s892 + $0x8] sm:$0xf]
    %v896 = vld [vmem:[%s892 + $0xc] sm:$0xf]
    %v897 = vld [vmem:[%s892 + $0x10] sm:$0xf]
    %v898 = vld [vmem:[%s892 + $0x14] sm:$0xf]
    %v899 = vld [vmem:[%s892 + $0x18] sm:$0xf]
    %v900 = vld [vmem:[%s892 + $0x1c] sm:$0xf]
    %v901 = vld [vmem:[%s892 + $0x20] sm:$0xf]
    %v902 = vld [vmem:[%s892 + $0x24] sm:$0xf]
    %v903 = vld [vmem:[%s892 + $0x28] sm:$0xf]
    %v904 = vld [vmem:[%s892 + $0x2c] sm:$0xf]
    %v905 = vld [vmem:[%s892 + $0x30] sm:$0xf]
    %v906 = vld [vmem:[%s892 + $0x34] sm:$0xf]
    %v907 = vld [vmem:[%s892 + $0x38] sm:$0xf]
    %v908 = vld [vmem:[%s892 + $0x3c] sm:$0xf]
    %s909 = scalar_lea.vmem %s2, 7
    %v910 = vld [vmem:[%s909] sm:$0x1]
    %v912 = vperm.slane %v910, 0
    %v916 = vunpack.c.l.b16 %v890
    %v917 = vunpack.c.l.b16 %v891
    %v918 = vsel %vm184, %v917, %v916
    %v919 = vpack.c.b16 %v918, %v918
    %v937 = vunpack.c.l.b16 %v893
    %v938 = vunpack.c.l.b16 %v894
    %v939 = vunpack.c.l.b16 %v895
    %v940 = vunpack.c.l.b16 %v896
    %v941 = vunpack.c.l.b16 %v897
    %v942 = vunpack.c.l.b16 %v898
    %v943 = vunpack.c.l.b16 %v899
    %v944 = vunpack.c.l.b16 %v900
    %v945 = vunpack.c.l.b16 %v901
    %v946 = vunpack.c.l.b16 %v902
    %v947 = vunpack.c.l.b16 %v903
    %v948 = vunpack.c.l.b16 %v904
    %v949 = vunpack.c.l.b16 %v905
    %v950 = vunpack.c.l.b16 %v906
    %v951 = vunpack.c.l.b16 %v907
    %v952 = vunpack.c.l.b16 %v908
    %v953 = vpack.c.b16 %v938, %v937
    %v954 = vpack.c.b16 %v940, %v939
    %v955 = vpack.c.b16 %v942, %v941
    %v956 = vpack.c.b16 %v944, %v943
    %v957 = vpack.c.b16 %v946, %v945
    %v958 = vpack.c.b16 %v948, %v947
    %v959 = vpack.c.b16 %v950, %v949
    %v960 = vpack.c.b16 %v952, %v951
    %969 = vmatpush.bf16.msra.mxu0 %v960
    %970 = vmatpush.bf16.msra.mxu0 %v959
    %971 = vmatpush.bf16.msra.mxu0 %v958
    %972 = vmatpush.bf16.msra.mxu0 %v957
    %973 = vmatpush.bf16.msra.mxu0 %v956
    %974 = vmatpush.bf16.msra.mxu0 %v955
    %975 = vmatpush.bf16.msra.mxu0 %v954
    %976 = vmatpush.bf16.msra.mxu0 %v953
    %977 = vmatmul.bf16.gmra.mxu0 %v919
    %v978 = vpop.f32.mrf.mxu0
    %v979 = vadd.f32 %v912, %v978
    %v980 = vpop.f32.mrf.mxu0
    %981 = vdwg.mxu0
    %v982 = vmax.f32 %v979, 0.0
    %s983 = scalar_lea.vmem %s3, 7
    %v984 = vld [vmem:[%s983] sm:$0x1]
    %v986 = vperm.slane %v984, 0
    %v988 = vmul.f32 %v982, %v986
    %s989 = scalar_lea.vmem %s4, 7
    %v990 = vld [vmem:[%s989] sm:$0x1]
    %v992 = vperm.slane %v990, 0
    %v994 = vadd.f32 %v988, %v992
    %996 = vrot.lane.b32.xlu0 %v364, 32
    %v997 = vpop.permute.xlu0 %996
    %1000 = vrot.lane.b32.xlu0 %v469, 64
    %v1001 = vpop.permute.xlu0 %1000
    %1004 = vrot.lane.b32.xlu0 %v574, 96
    %v1005 = vpop.permute.xlu0 %1004
    %1008 = vrot.lane.b32.xlu0 %v784, 32
    %v1009 = vpop.permute.xlu0 %1008
    %1012 = vrot.lane.b32.xlu0 %v889, 64
    %v1013 = vpop.permute.xlu0 %1012
    %1016 = vrot.lane.b32.xlu0 %v994, 96
    %v1017 = vpop.permute.xlu0 %1016
    %vm1019 = vcmask 261120
    %v1020 = vsel %vm1019, %v259, %v997
    %vm1021 = vcmask 523264
    %v1022 = vsel %vm1021, %v1020, %v1001
    %vm1023 = vcmask 785408
    %v1024 = vsel %vm1023, %v1022, %v1005
    %v1025 = vsel %vm1019, %v679, %v1009
    %v1026 = vsel %vm1021, %v1025, %v1013
    %v1027 = vsel %vm1023, %v1026, %v1017
    %v1030 = vrot.slane %v1027, 6
    %v1031 = vsel %vm105, %v1024, %v1030
    %1033 = vst [vmem:[#allocation2] sm:$0xf] %v1031
    // Predicated region
    $region22: #{mgn_forward.3} parent=1 // pred_check
      _
    $region23: #{mgn_forward.3} parent=1 // pred_check_branch
      %1035 = sbr.rel (0) target = $region25
    $region24: #{mgn_forward.3} parent=1 // pred_region
      %1037 = vsyncadd [#allocation3], 0
      %s1039 = sshll.u32 [#allocation2], 4
      %s1040 = int_to_ptr.vmem [resolvable:$true] %s1039
      %s1041 = sshll.u32 %s5, 4
      %s1042 = int_to_ptr.hbm [resolvable:$true] %s1041
      %1044 = dma.vmem_to_hbm [thread:$0]  %s1040, 64, %s1042, [#allocation3]
    $region25: #{mgn_forward.3} parent=1 // pred_fallthru
      _
    // Predicated region
    $region26: #{mgn_forward.3} parent=1 // pred_check
      _
    $region27: #{mgn_forward.3} parent=1 // pred_check_branch
      %1046 = sbr.rel (0) target = $region29
    $region28: #{mgn_forward.3} parent=1 // pred_region
      %1048 = dma.done [#allocation3], 64
    $region29: #{mgn_forward.3} parent=1 // pred_fallthru
      _
    %1049 = vsyncpa [#allocation3], 1

</llo_original>
